<compile_context>
chip_gen: v5e
topology: v5e:2x2
jax: 0.10.0
libtpu: 0.0.40
codegen_flags: <defaults>
</compile_context>

<pallas_src>
import jax
import jax.numpy as jnp
from jax import lax
from jax.experimental import pallas as pl
from jax.experimental.pallas import tpu as pltpu


def dy_kernel(x_ref, w_ref, o_ref, xp_ref):
    """Depthwise 3x3 conv with replicate padding, NHWC (channels on lanes).

    x_ref : (1, H, W, Ct)   unpadded input tile (VMEM)
    w_ref : (9, Ct)         per-channel taps, channels on lanes
    o_ref : (1, H, W, Ct)   output tile
    xp_ref: (H+2, W+2, Ct)  VMEM scratch: replicate-padded tile
    """
    _, H, W, Ct = o_ref.shape

    # Build the replicate-padded tile in VMEM (avoids an extra HBM pad pass).
    xp_ref[1:H + 1, 1:W + 1, :] = x_ref[0]                        # interior
    xp_ref[0:1, 1:W + 1, :] = x_ref[0, 0:1, :, :]                 # top edge
    xp_ref[H + 1:H + 2, 1:W + 1, :] = x_ref[0, H - 1:H, :, :]     # bottom edge
    xp_ref[:, 0:1, :] = xp_ref[:, 1:2, :]                         # left edge + corners
    xp_ref[:, W + 1:W + 2, :] = xp_ref[:, W:W + 1, :]             # right edge + corners

    w = w_ref[...].astype(jnp.float32)                            # (9, Ct)

    acc = jnp.zeros((H, W, Ct), jnp.float32)
    for ki in range(3):
        for kj in range(3):
            # Slice the padded tile straight from the ref: ki is a pure
            # address offset, kj a sublane offset (no lane rolls / big temps).
            patch = xp_ref[ki:ki + H, kj:kj + W, :].astype(jnp.float32)
            wk = w[ki * 3 + kj].reshape(1, 1, Ct)                 # per-lane weight
            acc = acc + patch * wk

    o_ref[...] = acc[None].astype(o_ref.dtype)


def dy_forward(x, dy_filter):
    """x: (N, C, H, W); dy_filter: (C, 1, 3, 3)  (pure depthwise)."""
    N, C, H, W = x.shape
    assert dy_filter.shape == (C, 1, 3, 3), "depthwise: out_channels == in_channels"

    # Lane-dense layout: channels last (NHWC); filter as (9, C) with C on lanes.
    x_nhwc = jnp.transpose(x, (0, 2, 3, 1))                       # (N, H, W, C)
    w9c = jnp.transpose(dy_filter.reshape(C, 9), (1, 0))          # (9, C)

    # Channel tiling (no halo needed).  Last block dim is either full C or a
    # multiple of 128 lanes (BlockSpec divisibility rule).
    Ct = 128 if (C % 128 == 0) else C
    grid = (N, C // Ct)

    # VMEM budget: double-buffered in/out blocks + padded scratch + margin.
    itemsize = jnp.dtype(x.dtype).itemsize
    in_bytes = H * W * Ct * itemsize
    out_bytes = H * W * Ct * itemsize
    scratch_bytes = (H + 2) * (W + 2) * Ct * itemsize
    need = 2 * (in_bytes + out_bytes) + scratch_bytes + (2 << 20)
    vmem_limit = int(min(max(need, 16 * 1024 * 1024), 64 * 1024 * 1024))

    out_nhwc = pl.pallas_call(
        dy_kernel,
        out_shape=jax.ShapeDtypeStruct((N, H, W, C), x.dtype),
        grid_spec=pltpu.PrefetchScalarGridSpec(
            num_scalar_prefetch=0,
            grid=grid,
            in_specs=[
                pl.BlockSpec((1, H, W, Ct), lambda n, c: (n, 0, 0, c)),
                pl.BlockSpec((9, Ct), lambda n, c: (0, c)),
            ],
            out_specs=pl.BlockSpec((1, H, W, Ct), lambda n, c: (n, 0, 0, c)),
            scratch_shapes=[pltpu.VMEM((H + 2, W + 2, Ct), x.dtype)],
        ),
        compiler_params=pltpu.CompilerParams(
            dimension_semantics=("parallel", "parallel"),
            vmem_limit_bytes=vmem_limit),
        cost_estimate=pl.CostEstimate(
            flops=18 * N * C * H * W,
            transcendentals=0,
            bytes_accessed=8 * N * C * H * W),
    )(x_nhwc, w9c)

    # Back to the module's NCHW output layout.
    return jnp.transpose(out_nhwc, (0, 3, 1, 2))


def reference_dy(x, dy_filter):
    """Pure-JAX reference: depthwise conv on replicate-padded input (NCHW)."""
    C = x.shape[1]
    x_pad = jnp.pad(x, ((0, 0), (0, 0), (1, 1), (1, 1)), mode="edge")
    return lax.conv_general_dilated(
        x_pad, dy_filter,
        window_strides=(1, 1), padding="VALID",
        dimension_numbers=("NCHW", "OIHW", "NCHW"),
        feature_group_count=C)


if __name__ == "__main__":
    # Small deterministic setup: batch=2, channels=4, spatial=16x16.
    N, C, H, W = 2, 4, 16, 16

    key = jax.random.PRNGKey(0)
    x = jax.random.normal(key, (N, C, H, W), dtype=jnp.float32)

    # Deterministic dy filter: Sobel-y kernel with a per-channel scale,
    # shape (C, 1, 3, 3) as in the module.
    sobel_y = jnp.array([[-1.0, -2.0, -1.0],
                         [0.0,  0.0,  0.0],
                         [1.0,  2.0,  1.0]], dtype=jnp.float32) / 8.0
    ch_scale = (1.0 + 0.25 * jnp.arange(C, dtype=jnp.float32)).reshape(C, 1, 1, 1)
    dy_filter = ch_scale * sobel_y.reshape(1, 1, 3, 3)            # (C, 1, 3, 3)

    out = dy_forward(x, dy_filter)
    out = jax.block_until_ready(out)

    ref = jax.block_until_ready(reference_dy(x, dy_filter))
    assert out.shape == (N, C, H, W)
    assert jnp.allclose(out, ref, atol=1e-5, rtol=1e-5)

    print("KERNEL_OK")
</pallas_src>

<mosaic_0001>
module attributes {stable_mosaic.version = 11 : i64} {
  func.func @dy_kernel(%arg0: i32, %arg1: i32, %arg2: memref<1x16x16x4xf32, #tpu.memory_space<vmem>>, %arg3: memref<9x4xf32, #tpu.memory_space<vmem>>, %arg4: memref<1x16x16x4xf32, #tpu.memory_space<vmem>>, %arg5: memref<18x18x4xf32, #tpu.memory_space<vmem>>) attributes {dimension_semantics = [#tpu.dimension_semantics<parallel>, #tpu.dimension_semantics<parallel>], iteration_bounds = array<i64: 2, 1>, scalar_prefetch = 0 : i64, scratch_operands = 1 : i64, tpu.core_type = #tpu.core_type<tc>, window_params = [{transform_indices = @transform_0, window_bounds = array<i64: 1, 16, 16, 4>}, {transform_indices = @transform_1, window_bounds = array<i64: 9, 4>}, {transform_indices = @transform_2, window_bounds = array<i64: 1, 16, 16, 4>}]} {
    %c0 = arith.constant 0 : index
    %c0_0 = arith.constant 0 : index
    %c0_1 = arith.constant 0 : index
    %c0_2 = arith.constant 0 : index
    %0 = vector.load %arg2[%c0, %c0_0, %c0_1, %c0_2] : memref<1x16x16x4xf32, #tpu.memory_space<vmem>>, vector<1x16x16x4xf32>
    %1 = vector.shape_cast %0 : vector<1x16x16x4xf32> to vector<16x16x4xf32>
    %c1 = arith.constant 1 : index
    %c1_3 = arith.constant 1 : index
    %c0_4 = arith.constant 0 : index
    %2 = vector.load %arg5[%c1, %c1_3, %c0_4] : memref<18x18x4xf32, #tpu.memory_space<vmem>>, vector<16x16x4xf32>
    tpu.vector_store %arg5[%c1, %c1_3, %c0_4], %1 {strides = array<i32>} : memref<18x18x4xf32, #tpu.memory_space<vmem>>, vector<16x16x4xf32>,
    %c0_5 = arith.constant 0 : index
    %c0_6 = arith.constant 0 : index
    %c0_7 = arith.constant 0 : index
    %c0_8 = arith.constant 0 : index
    %3 = vector.load %arg2[%c0_5, %c0_6, %c0_7, %c0_8] : memref<1x16x16x4xf32, #tpu.memory_space<vmem>>, vector<1x1x16x4xf32>
    %4 = vector.shape_cast %3 : vector<1x1x16x4xf32> to vector<1x16x4xf32>
    %c0_9 = arith.constant 0 : index
    %c1_10 = arith.constant 1 : index
    %c0_11 = arith.constant 0 : index
    %5 = vector.load %arg5[%c0_9, %c1_10, %c0_11] : memref<18x18x4xf32, #tpu.memory_space<vmem>>, vector<1x16x4xf32>
    tpu.vector_store %arg5[%c0_9, %c1_10, %c0_11], %4 {strides = array<i32>} : memref<18x18x4xf32, #tpu.memory_space<vmem>>, vector<1x16x4xf32>,
    %c0_12 = arith.constant 0 : index
    %c15 = arith.constant 15 : index
    %c0_13 = arith.constant 0 : index
    %c0_14 = arith.constant 0 : index
    %6 = vector.load %arg2[%c0_12, %c15, %c0_13, %c0_14] : memref<1x16x16x4xf32, #tpu.memory_space<vmem>>, vector<1x1x16x4xf32>
    %7 = vector.shape_cast %6 : vector<1x1x16x4xf32> to vector<1x16x4xf32>
    %c17 = arith.constant 17 : index
    %c1_15 = arith.constant 1 : index
    %c0_16 = arith.constant 0 : index
    %8 = vector.load %arg5[%c17, %c1_15, %c0_16] : memref<18x18x4xf32, #tpu.memory_space<vmem>>, vector<1x16x4xf32>
    tpu.vector_store %arg5[%c17, %c1_15, %c0_16], %7 {strides = array<i32>} : memref<18x18x4xf32, #tpu.memory_space<vmem>>, vector<1x16x4xf32>,
    %c0_17 = arith.constant 0 : index
    %c1_18 = arith.constant 1 : index
    %c0_19 = arith.constant 0 : index
    %9 = vector.load %arg5[%c0_17, %c1_18, %c0_19] : memref<18x18x4xf32, #tpu.memory_space<vmem>>, vector<18x1x4xf32>
    %c0_20 = arith.constant 0 : index
    %c0_21 = arith.constant 0 : index
    %c0_22 = arith.constant 0 : index
    %10 = vector.load %arg5[%c0_20, %c0_21, %c0_22] : memref<18x18x4xf32, #tpu.memory_space<vmem>>, vector<18x1x4xf32>
    tpu.vector_store %arg5[%c0_20, %c0_21, %c0_22], %9 {strides = array<i32>} : memref<18x18x4xf32, #tpu.memory_space<vmem>>, vector<18x1x4xf32>,
    %c0_23 = arith.constant 0 : index
    %c16 = arith.constant 16 : index
    %c0_24 = arith.constant 0 : index
    %11 = vector.load %arg5[%c0_23, %c16, %c0_24] : memref<18x18x4xf32, #tpu.memory_space<vmem>>, vector<18x1x4xf32>
    %c0_25 = arith.constant 0 : index
    %c17_26 = arith.constant 17 : index
    %c0_27 = arith.constant 0 : index
    %12 = vector.load %arg5[%c0_25, %c17_26, %c0_27] : memref<18x18x4xf32, #tpu.memory_space<vmem>>, vector<18x1x4xf32>
    tpu.vector_store %arg5[%c0_25, %c17_26, %c0_27], %11 {strides = array<i32>} : memref<18x18x4xf32, #tpu.memory_space<vmem>>, vector<18x1x4xf32>,
    %c0_28 = arith.constant 0 : index
    %c0_29 = arith.constant 0 : index
    %13 = vector.load %arg3[%c0_28, %c0_29] : memref<9x4xf32, #tpu.memory_space<vmem>>, vector<9x4xf32>
    %cst = arith.constant 0.000000e+00 : f32
    %14 = vector.broadcast %cst : f32 to vector<16x16x4xf32>
    %c0_30 = arith.constant 0 : index
    %c0_31 = arith.constant 0 : index
    %c0_32 = arith.constant 0 : index
    %15 = vector.load %arg5[%c0_30, %c0_31, %c0_32] : memref<18x18x4xf32, #tpu.memory_space<vmem>>, vector<16x16x4xf32>
    %16 = vector.extract_strided_slice %13 {offsets = [0, 0], sizes = [1, 4], strides = [1, 1]} : vector<9x4xf32> to vector<1x4xf32>
    %17 = vector.shape_cast %16 : vector<1x4xf32> to vector<4xf32>
    %18 = vector.shape_cast %17 : vector<4xf32> to vector<1x1x4xf32>
    %19 = vector.broadcast %18 : vector<1x1x4xf32> to vector<16x16x4xf32>
    %20 = arith.mulf %15, %19 : vector<16x16x4xf32>
    %21 = arith.addf %14, %20 : vector<16x16x4xf32>
    %c0_33 = arith.constant 0 : index
    %c1_34 = arith.constant 1 : index
    %c0_35 = arith.constant 0 : index
    %22 = vector.load %arg5[%c0_33, %c1_34, %c0_35] : memref<18x18x4xf32, #tpu.memory_space<vmem>>, vector<16x16x4xf32>
    %23 = vector.extract_strided_slice %13 {offsets = [1, 0], sizes = [1, 4], strides = [1, 1]} : vector<9x4xf32> to vector<1x4xf32>
    %24 = vector.shape_cast %23 : vector<1x4xf32> to vector<4xf32>
    %25 = vector.shape_cast %24 : vector<4xf32> to vector<1x1x4xf32>
    %26 = vector.broadcast %25 : vector<1x1x4xf32> to vector<16x16x4xf32>
    %27 = arith.mulf %22, %26 : vector<16x16x4xf32>
    %28 = arith.addf %21, %27 : vector<16x16x4xf32>
    %c0_36 = arith.constant 0 : index
    %c2 = arith.constant 2 : index
    %c0_37 = arith.constant 0 : index
    %29 = vector.load %arg5[%c0_36, %c2, %c0_37] : memref<18x18x4xf32, #tpu.memory_space<vmem>>, vector<16x16x4xf32>
    %30 = vector.extract_strided_slice %13 {offsets = [2, 0], sizes = [1, 4], strides = [1, 1]} : vector<9x4xf32> to vector<1x4xf32>
    %31 = vector.shape_cast %30 : vector<1x4xf32> to vector<4xf32>
    %32 = vector.shape_cast %31 : vector<4xf32> to vector<1x1x4xf32>
    %33 = vector.broadcast %32 : vector<1x1x4xf32> to vector<16x16x4xf32>
    %34 = arith.mulf %29, %33 : vector<16x16x4xf32>
    %35 = arith.addf %28, %34 : vector<16x16x4xf32>
    %c1_38 = arith.constant 1 : index
    %c0_39 = arith.constant 0 : index
    %c0_40 = arith.constant 0 : index
    %36 = vector.load %arg5[%c1_38, %c0_39, %c0_40] : memref<18x18x4xf32, #tpu.memory_space<vmem>>, vector<16x16x4xf32>
    %37 = vector.extract_strided_slice %13 {offsets = [3, 0], sizes = [1, 4], strides = [1, 1]} : vector<9x4xf32> to vector<1x4xf32>
    %38 = vector.shape_cast %37 : vector<1x4xf32> to vector<4xf32>
    %39 = vector.shape_cast %38 : vector<4xf32> to vector<1x1x4xf32>
    %40 = vector.broadcast %39 : vector<1x1x4xf32> to vector<16x16x4xf32>
    %41 = arith.mulf %36, %40 : vector<16x16x4xf32>
    %42 = arith.addf %35, %41 : vector<16x16x4xf32>
    %c1_41 = arith.constant 1 : index
    %c1_42 = arith.constant 1 : index
    %c0_43 = arith.constant 0 : index
    %43 = vector.load %arg5[%c1_41, %c1_42, %c0_43] : memref<18x18x4xf32, #tpu.memory_space<vmem>>, vector<16x16x4xf32>
    %44 = vector.extract_strided_slice %13 {offsets = [4, 0], sizes = [1, 4], strides = [1, 1]} : vector<9x4xf32> to vector<1x4xf32>
    %45 = vector.shape_cast %44 : vector<1x4xf32> to vector<4xf32>
    %46 = vector.shape_cast %45 : vector<4xf32> to vector<1x1x4xf32>
    %47 = vector.broadcast %46 : vector<1x1x4xf32> to vector<16x16x4xf32>
    %48 = arith.mulf %43, %47 : vector<16x16x4xf32>
    %49 = arith.addf %42, %48 : vector<16x16x4xf32>
    %c1_44 = arith.constant 1 : index
    %c2_45 = arith.constant 2 : index
    %c0_46 = arith.constant 0 : index
    %50 = vector.load %arg5[%c1_44, %c2_45, %c0_46] : memref<18x18x4xf32, #tpu.memory_space<vmem>>, vector<16x16x4xf32>
    %51 = vector.extract_strided_slice %13 {offsets = [5, 0], sizes = [1, 4], strides = [1, 1]} : vector<9x4xf32> to vector<1x4xf32>
    %52 = vector.shape_cast %51 : vector<1x4xf32> to vector<4xf32>
    %53 = vector.shape_cast %52 : vector<4xf32> to vector<1x1x4xf32>
    %54 = vector.broadcast %53 : vector<1x1x4xf32> to vector<16x16x4xf32>
    %55 = arith.mulf %50, %54 : vector<16x16x4xf32>
    %56 = arith.addf %49, %55 : vector<16x16x4xf32>
    %c2_47 = arith.constant 2 : index
    %c0_48 = arith.constant 0 : index
    %c0_49 = arith.constant 0 : index
    %57 = vector.load %arg5[%c2_47, %c0_48, %c0_49] : memref<18x18x4xf32, #tpu.memory_space<vmem>>, vector<16x16x4xf32>
    %58 = vector.extract_strided_slice %13 {offsets = [6, 0], sizes = [1, 4], strides = [1, 1]} : vector<9x4xf32> to vector<1x4xf32>
    %59 = vector.shape_cast %58 : vector<1x4xf32> to vector<4xf32>
    %60 = vector.shape_cast %59 : vector<4xf32> to vector<1x1x4xf32>
    %61 = vector.broadcast %60 : vector<1x1x4xf32> to vector<16x16x4xf32>
    %62 = arith.mulf %57, %61 : vector<16x16x4xf32>
    %63 = arith.addf %56, %62 : vector<16x16x4xf32>
    %c2_50 = arith.constant 2 : index
    %c1_51 = arith.constant 1 : index
    %c0_52 = arith.constant 0 : index
    %64 = vector.load %arg5[%c2_50, %c1_51, %c0_52] : memref<18x18x4xf32, #tpu.memory_space<vmem>>, vector<16x16x4xf32>
    %65 = vector.extract_strided_slice %13 {offsets = [7, 0], sizes = [1, 4], strides = [1, 1]} : vector<9x4xf32> to vector<1x4xf32>
    %66 = vector.shape_cast %65 : vector<1x4xf32> to vector<4xf32>
    %67 = vector.shape_cast %66 : vector<4xf32> to vector<1x1x4xf32>
    %68 = vector.broadcast %67 : vector<1x1x4xf32> to vector<16x16x4xf32>
    %69 = arith.mulf %64, %68 : vector<16x16x4xf32>
    %70 = arith.addf %63, %69 : vector<16x16x4xf32>
    %c2_53 = arith.constant 2 : index
    %c2_54 = arith.constant 2 : index
    %c0_55 = arith.constant 0 : index
    %71 = vector.load %arg5[%c2_53, %c2_54, %c0_55] : memref<18x18x4xf32, #tpu.memory_space<vmem>>, vector<16x16x4xf32>
    %72 = vector.extract_strided_slice %13 {offsets = [8, 0], sizes = [1, 4], strides = [1, 1]} : vector<9x4xf32> to vector<1x4xf32>
    %73 = vector.shape_cast %72 : vector<1x4xf32> to vector<4xf32>
    %74 = vector.shape_cast %73 : vector<4xf32> to vector<1x1x4xf32>
    %75 = vector.broadcast %74 : vector<1x1x4xf32> to vector<16x16x4xf32>
    %76 = arith.mulf %71, %75 : vector<16x16x4xf32>
    %77 = arith.addf %70, %76 : vector<16x16x4xf32>
    %78 = vector.shape_cast %77 : vector<16x16x4xf32> to vector<1x16x16x4xf32>
    %c0_56 = arith.constant 0 : index
    %c0_57 = arith.constant 0 : index
    %c0_58 = arith.constant 0 : index
    %c0_59 = arith.constant 0 : index
    %79 = vector.load %arg4[%c0_56, %c0_57, %c0_58, %c0_59] : memref<1x16x16x4xf32, #tpu.memory_space<vmem>>, vector<1x16x16x4xf32>
    tpu.vector_store %arg4[%c0_56, %c0_57, %c0_58, %c0_59], %78 {strides = array<i32>} : memref<1x16x16x4xf32, #tpu.memory_space<vmem>>, vector<1x16x16x4xf32>,
    return
  }
  func.func @transform_0(%arg0: i32, %arg1: i32) -> (i32, i32, i32, i32) {
    %c0_i32 = arith.constant 0 : i32
    %c0_i32_0 = arith.constant 0 : i32
    %c0_i32_1 = arith.constant 0 : i32
    return %arg0, %c0_i32, %c0_i32_0, %arg1 : i32, i32, i32, i32
  }
  func.func @transform_1(%arg0: i32, %arg1: i32) -> (i32, i32) {
    %c0_i32 = arith.constant 0 : i32
    %c0_i32_0 = arith.constant 0 : i32
    return %c0_i32, %arg1 : i32, i32
  }
  func.func @transform_2(%arg0: i32, %arg1: i32) -> (i32, i32, i32, i32) {
    %c0_i32 = arith.constant 0 : i32
    %c0_i32_0 = arith.constant 0 : i32
    %c0_i32_1 = arith.constant 0 : i32
    return %arg0, %c0_i32, %c0_i32_0, %arg1 : i32, i32, i32, i32
  }
}

</mosaic_0001>

<llo_original>
// kernel: tpu_custom_call.1
$region0: #{tpu_custom_call.1}
  #allocation0 [shape = 'u32[]', space=smem, size = 0x4, offset = 0x4, fixed_abs, tag = 'smem constant byte address 0x4 - core index']
  #allocation1 [shape = 'u32[72,128]{1,0:T(1,128)}', space=vmem, size = 0x9000, scoped, tag = 'internal scratch']
  #allocation2 [shape = 'f32[18,18,4]{2,1,0:T(8,128)}', space=vmem, size = 0x36000, scoped, tag = 'scratch operand']
  %s0 = inlined_call_operand.vmem [shape: f32[2,16,16,4], index: 0, kind: input, shape index: {}]
  %s1 = inlined_call_operand.vmem [shape: f32[9,4], index: 1, kind: input, shape index: {}]
  %s2 = inlined_call_operand.vmem [shape: f32[2,16,16,4], index: 2, kind: output, shape index: {}]
  %s3 = sld [smem:[#allocation0]]
  $region41: #{tpu_custom_call.1} parent=0
    _
  %s5 = ssub.s32 1, %s3
  %s6 = scalar_select 0, %s5, %s3
  loop: start=0, step=1, limit=4
  $region2: #{tpu_custom_call.1} parent=0 // loop_pre_header
    _
  $region3: #{tpu_custom_call.1} parent=0 // loop_header
    %s8 = sphi 0, %s12
    %p9 = scmp.ge.s32.totalorder %s8, 4
    %s15 = sphi 0, %s27
    %s16 = sphi 0, %s23
    %s17 = sphi 0, %s15
    %s18 = sphi 0, %s16
    %s19 = sphi 0, %s17
    %s20 = sphi 0, %s18
    %s32 = sphi 0, %s34
    %s35 = sphi 0, %s32
    %s36 = sphi 0, %s35
    %s52 = sphi 0, %s36
    %s58 = sphi 0, %s60
    %s61 = sphi 0, %s58
    %s62 = sphi 0, %s61
    %s78 = sphi 0, %s62
    %s86 = sphi 0, %s88
    %s89 = sphi 0, %s86
    %s90 = sphi 0, %s89
    %s106 = sphi 0, %s90
  $region4: #{tpu_custom_call.1} parent=0 // loop_header_branch
    %11 = sbr.rel (%p9) target = $region8
  $region5: #{tpu_custom_call.1} parent=0 // loop_body
    %s13 = ssub.s32 %s8, 1
    %s14 = ssub.s32 %s8, 2
    %s21 = sadd.s32 1, %s16
    %p22 = scmp.ge.s32.totalorder %s21, 1
    %s23 = scalar_select %p22, 0, %s21
    %s24 = sadd.s32 1, %s15
    %s25 = scalar_select %p22, %s24, %s15
    %p26 = scmp.ge.s32.totalorder %s25, 2
    %s27 = scalar_select %p26, 0, %s25
    %s28 = ssub.s32 %s15, %s27
    %s29 = ssub.s32 %s16, %s23
    %s30 = sor.u32 %s28, %s29
    %p31 = scmp.eq.s32.totalorder %s30, 0
    %s33 = sadd.s32 %s32, 1
    %s34 = scalar_select %p31, %s32, %s33
    %p37 = pneg %p31
    %p38 = scmp.eq.s32.totalorder %s8, 1
    %p39 = por %p37, %p38
    %p40 = scmp.ne.s32.totalorder %s32, %s35
    %p41 = scmp.eq.s32.totalorder %s8, 0
    %p42 = por %p40, %p41
    %p43 = scmp.ne.s32.totalorder %s32, %s35
    %p44 = scmp.eq.s32.totalorder %s13, 1
    %p45 = por %p43, %p44
    %p46 = scmp.ne.s32.totalorder %s35, %s36
    %p47 = scmp.eq.s32.totalorder %s13, 0
    %p48 = por %p46, %p47
    %p49 = scmp.ne.s32.totalorder %s35, %s36
    %p50 = scmp.eq.s32.totalorder %s14, 1
    %p51 = por %p49, %p50
    %p53 = scmp.ne.s32.totalorder %s36, %s52
    %p54 = scmp.eq.s32.totalorder %s14, 0
    %p55 = por %p53, %p54
    %s56 = ssub.s32 %s16, %s23
    %p57 = scmp.eq.s32.totalorder %s56, 0
    %s59 = sadd.s32 %s58, 1
    %s60 = scalar_select %p57, %s58, %s59
    %p63 = pneg %p57
    %p64 = scmp.eq.s32.totalorder %s8, 1
    %p65 = por %p63, %p64
    %p66 = scmp.ne.s32.totalorder %s58, %s61
    %p67 = scmp.eq.s32.totalorder %s8, 0
    %p68 = por %p66, %p67
    %p69 = scmp.ne.s32.totalorder %s58, %s61
    %p70 = scmp.eq.s32.totalorder %s13, 1
    %p71 = por %p69, %p70
    %p72 = scmp.ne.s32.totalorder %s61, %s62
    %p73 = scmp.eq.s32.totalorder %s13, 0
    %p74 = por %p72, %p73
    %p75 = scmp.ne.s32.totalorder %s61, %s62
    %p76 = scmp.eq.s32.totalorder %s14, 1
    %p77 = por %p75, %p76
    %p79 = scmp.ne.s32.totalorder %s62, %s78
    %p80 = scmp.eq.s32.totalorder %s14, 0
    %p81 = por %p79, %p80
    %s82 = ssub.s32 %s15, %s27
    %s83 = ssub.s32 %s16, %s23
    %s84 = sor.u32 %s82, %s83
    %p85 = scmp.eq.s32.totalorder %s84, 0
    %s87 = sadd.s32 %s86, 1
    %s88 = scalar_select %p85, %s86, %s87
    %p91 = pneg %p85
    %p92 = scmp.eq.s32.totalorder %s8, 1
    %p93 = por %p91, %p92
    %p94 = scmp.ne.s32.totalorder %s86, %s89
    %p95 = scmp.eq.s32.totalorder %s8, 0
    %p96 = por %p94, %p95
    %p97 = scmp.ne.s32.totalorder %s86, %s89
    %p98 = scmp.eq.s32.totalorder %s13, 1
    %p99 = por %p97, %p98
    %p100 = scmp.ne.s32.totalorder %s89, %s90
    %p101 = scmp.eq.s32.totalorder %s13, 0
    %p102 = por %p100, %p101
    %p103 = scmp.ne.s32.totalorder %s89, %s90
    %p104 = scmp.eq.s32.totalorder %s14, 1
    %p105 = por %p103, %p104
    %p107 = scmp.ne.s32.totalorder %s90, %s106
    %p108 = scmp.eq.s32.totalorder %s14, 0
    %p109 = por %p107, %p108
    %p110 = scmp.le.s32.totalorder 1, %s8
    %p111 = scmp.lt.s32.totalorder %s8, 3
    %p112 = pnand %p110, %p111
    %p113 = pneg %p112
    // Predicated region
    $region9: #{tpu_custom_call.1} parent=5 // pred_check
      _
    $region10: #{tpu_custom_call.1} parent=5 // pred_check_branch
      %115 = sbr.rel (%p112) target = $region12
    $region11: #{tpu_custom_call.1} parent=5 // pred_region
      %s116 = ssub.s32 %s8, 1
      // Predicated region
      $region13: #{tpu_custom_call.1} parent=11 // pred_check
        %p117 = pneg %p74
      $region14: #{tpu_custom_call.1} parent=11 // pred_check_branch
        %119 = sbr.rel (%p117) target = $region16
      $region15: #{tpu_custom_call.1} parent=11 // pred_region
        %p120 = scmp.lt.s32.totalorder %s18, 0
        %s121 = scalar_select %p120, %s18, 0
        %s122 = smul.addr %s121, 8
        %s123 = scalar_lea.vmem %s1, %s122
      $region16: #{tpu_custom_call.1} parent=11 // pred_fallthru
        _
    $region12: #{tpu_custom_call.1} parent=5 // pred_fallthru
      _
    %p124 = scmp.lt.s32.totalorder %s8, 2
    // Predicated region
    $region17: #{tpu_custom_call.1} parent=5 // pred_check
      %p125 = pneg %p124
    $region18: #{tpu_custom_call.1} parent=5 // pred_check_branch
      %127 = sbr.rel (%p125) target = $region20
    $region19: #{tpu_custom_call.1} parent=5 // pred_region
      // Predicated region
      $region21: #{tpu_custom_call.1} parent=19 // pred_check
        %p128 = pneg %p42
      $region22: #{tpu_custom_call.1} parent=19 // pred_check_branch
        %130 = sbr.rel (%p128) target = $region24
      $region23: #{tpu_custom_call.1} parent=19 // pred_region
        %p131 = scmp.lt.s32.totalorder %s15, 1
        %s132 = scalar_select %p131, %s15, 1
        %p133 = scmp.lt.s32.totalorder %s16, 0
        %s134 = scalar_select %p133, %s16, 0
        %s135 = smul.addr %s132, 32
        %s136 = sadd.s32 %s134, %s135
        %s137 = smul.addr %s136, 8
        %s138 = scalar_lea.vmem %s0, %s137
      $region24: #{tpu_custom_call.1} parent=19 // pred_fallthru
        _
    $region20: #{tpu_custom_call.1} parent=5 // pred_fallthru
      _
    %p139 = scmp.le.s32.totalorder 1, %s8
    %p140 = scmp.lt.s32.totalorder %s8, 3
    %p141 = pnand %p139, %p140
    %p142 = pneg %p141
    // Predicated region
    $region25: #{tpu_custom_call.1} parent=5 // pred_check
      _
    $region26: #{tpu_custom_call.1} parent=5 // pred_check_branch
      %144 = sbr.rel (%p141) target = $region28
    $region27: #{tpu_custom_call.1} parent=5 // pred_region
      %s145 = ssub.s32 %s8, 1
      %p146 = scmp.lt.s32.totalorder %s17, 1
      %s147 = scalar_select %p146, %s17, 1
      %p148 = scmp.lt.s32.totalorder %s18, 0
      %s149 = scalar_select %p148, %s18, 0
      %s150 = smul.addr %s147, 32
      %s151 = sadd.s32 %s149, %s150
      %s152 = smul.addr %s151, 8
      %s153 = scalar_lea.vmem %s0, %s152
      %p154 = pneg %p48
      %p155 = pneg %p45
      %p156 = scmp.lt.s32.totalorder %s18, 0
      %s157 = scalar_select %p156, %s18, 0
      %s158 = smul.addr %s157, 8
      %s159 = scalar_lea.vmem %s1, %s158
      %p160 = pneg %p74
      %p161 = pneg %p71
      %p162 = pneg %p102
      %p163 = pneg %p99
      %p164 = scmp.lt.s32.totalorder %s17, 1
      %s165 = scalar_select %p164, %s17, 1
      %p166 = scmp.lt.s32.totalorder %s18, 0
      %s167 = scalar_select %p166, %s18, 0
      %s168 = smul.addr %s165, 32
      %s169 = sadd.s32 %s167, %s168
      %s170 = smul.addr %s169, 8
      %s171 = scalar_lea.vmem %s2, %s170
      %p172 = scmp.lt.s32.totalorder %s17, 1
      %s173 = scalar_select %p172, %s17, 1
      %p174 = scmp.lt.s32.totalorder %s18, 0
      %s175 = scalar_select %p174, %s18, 0
      %s176 = smul.addr %s173, 32
      %s177 = sadd.s32 %s175, %s176
      %s178 = smul.addr %s177, 8
      %s179 = scalar_lea.vmem %s0, %s178
      %p180 = scmp.lt.s32.totalorder %s18, 0
      %s181 = scalar_select %p180, %s18, 0
      %s182 = smul.addr %s181, 8
      %s183 = scalar_lea.vmem %s1, %s182
      %p184 = scmp.lt.s32.totalorder %s17, 1
      %s185 = scalar_select %p184, %s17, 1
      %p186 = scmp.lt.s32.totalorder %s18, 0
      %s187 = scalar_select %p186, %s18, 0
      %s188 = smul.addr %s185, 32
      %s189 = sadd.s32 %s187, %s188
      %s190 = smul.addr %s189, 8
      %s191 = scalar_lea.vmem %s2, %s190
      %v192 = vld [vmem:[%s179] sm:$0xff]
      %v193 = vld [vmem:[%s179 + $0x8] sm:$0xff]
      %v194 = vld [vmem:[%s179 + $0x10] sm:$0xff]
      %v195 = vld [vmem:[%s179 + $0x18] sm:$0xff]
      %v196 = vld [vmem:[%s179 + $0x20] sm:$0xff]
      %v197 = vld [vmem:[%s179 + $0x28] sm:$0xff]
      %v198 = vld [vmem:[%s179 + $0x30] sm:$0xff]
      %v199 = vld [vmem:[%s179 + $0x38] sm:$0xff]
      %v200 = vld [vmem:[%s179 + $0x40] sm:$0xff]
      %v201 = vld [vmem:[%s179 + $0x48] sm:$0xff]
      %v202 = vld [vmem:[%s179 + $0x50] sm:$0xff]
      %v203 = vld [vmem:[%s179 + $0x58] sm:$0xff]
      %v204 = vld [vmem:[%s179 + $0x60] sm:$0xff]
      %v205 = vld [vmem:[%s179 + $0x68] sm:$0xff]
      %v206 = vld [vmem:[%s179 + $0x70] sm:$0xff]
      %v207 = vld [vmem:[%s179 + $0x78] sm:$0xff]
      %v208 = vld [vmem:[%s179 + $0x80] sm:$0xff]
      %v209 = vld [vmem:[%s179 + $0x88] sm:$0xff]
      %v210 = vld [vmem:[%s179 + $0x90] sm:$0xff]
      %v211 = vld [vmem:[%s179 + $0x98] sm:$0xff]
      %v212 = vld [vmem:[%s179 + $0xa0] sm:$0xff]
      %v213 = vld [vmem:[%s179 + $0xa8] sm:$0xff]
      %v214 = vld [vmem:[%s179 + $0xb0] sm:$0xff]
      %v215 = vld [vmem:[%s179 + $0xb8] sm:$0xff]
      %v216 = vld [vmem:[%s179 + $0xc0] sm:$0xff]
      %v217 = vld [vmem:[%s179 + $0xc8] sm:$0xff]
      %v218 = vld [vmem:[%s179 + $0xd0] sm:$0xff]
      %v219 = vld [vmem:[%s179 + $0xd8] sm:$0xff]
      %v220 = vld [vmem:[%s179 + $0xe0] sm:$0xff]
      %v221 = vld [vmem:[%s179 + $0xe8] sm:$0xff]
      %v222 = vld [vmem:[%s179 + $0xf0] sm:$0xff]
      %v223 = vld [vmem:[%s179 + $0xf8] sm:$0xff]
      %s224 = scalar_lea.vmem [#allocation2], 24
      %vm225 = vcmask 31744
      %226 = vst.msk [vmem:[%s224 + $0x1] sm:$0xff] %vm225, %v192
      %227 = vst.msk [vmem:[%s224 + $0x9] sm:$0xff] %vm225, %v193
      %228 = vst.msk [vmem:[%s224 + $0x19] sm:$0xff] %vm225, %v194
      %229 = vst.msk [vmem:[%s224 + $0x21] sm:$0xff] %vm225, %v195
      %230 = vst.msk [vmem:[%s224 + $0x31] sm:$0xff] %vm225, %v196
      %231 = vst.msk [vmem:[%s224 + $0x39] sm:$0xff] %vm225, %v197
      %232 = vst.msk [vmem:[%s224 + $0x49] sm:$0xff] %vm225, %v198
      %233 = vst.msk [vmem:[%s224 + $0x51] sm:$0xff] %vm225, %v199
      %234 = vst.msk [vmem:[%s224 + $0x61] sm:$0xff] %vm225, %v200
      %235 = vst.msk [vmem:[%s224 + $0x69] sm:$0xff] %vm225, %v201
      %236 = vst.msk [vmem:[%s224 + $0x79] sm:$0xff] %vm225, %v202
      %237 = vst.msk [vmem:[%s224 + $0x81] sm:$0xff] %vm225, %v203
      %238 = vst.msk [vmem:[%s224 + $0x91] sm:$0xff] %vm225, %v204
      %239 = vst.msk [vmem:[%s224 + $0x99] sm:$0xff] %vm225, %v205
      %240 = vst.msk [vmem:[%s224 + $0xa9] sm:$0xff] %vm225, %v206
      %241 = vst.msk [vmem:[%s224 + $0xb1] sm:$0xff] %vm225, %v207
      %242 = vst.msk [vmem:[%s224 + $0xc1] sm:$0xff] %vm225, %v208
      %243 = vst.msk [vmem:[%s224 + $0xc9] sm:$0xff] %vm225, %v209
      %244 = vst.msk [vmem:[%s224 + $0xd9] sm:$0xff] %vm225, %v210
      %245 = vst.msk [vmem:[%s224 + $0xe1] sm:$0xff] %vm225, %v211
      %246 = vst.msk [vmem:[%s224 + $0xf1] sm:$0xff] %vm225, %v212
      %247 = vst.msk [vmem:[%s224 + $0xf9] sm:$0xff] %vm225, %v213
      %248 = vst.msk [vmem:[%s224 + $0x109] sm:$0xff] %vm225, %v214
      %249 = vst.msk [vmem:[%s224 + $0x111] sm:$0xff] %vm225, %v215
      %250 = vst.msk [vmem:[%s224 + $0x121] sm:$0xff] %vm225, %v216
      %251 = vst.msk [vmem:[%s224 + $0x129] sm:$0xff] %vm225, %v217
      %252 = vst.msk [vmem:[%s224 + $0x139] sm:$0xff] %vm225, %v218
      %253 = vst.msk [vmem:[%s224 + $0x141] sm:$0xff] %vm225, %v219
      %254 = vst.msk [vmem:[%s224 + $0x151] sm:$0xff] %vm225, %v220
      %255 = vst.msk [vmem:[%s224 + $0x159] sm:$0xff] %vm225, %v221
      %256 = vst.msk [vmem:[%s224 + $0x169] sm:$0xff] %vm225, %v222
      %257 = vst.msk [vmem:[%s224 + $0x171] sm:$0xff] %vm225, %v223
      %v258 = vld [vmem:[%s179] sm:$0xff]
      %v259 = vld [vmem:[%s179 + $0x8] sm:$0xff]
      %260 = vst.msk [vmem:[#allocation2 + $0x1] sm:$0xff] %vm225, %v258
      %261 = vst.msk [vmem:[#allocation2 + $0x9] sm:$0xff] %vm225, %v259
      %s262 = scalar_lea.vmem %s179, 240
      %v263 = vld [vmem:[%s262] sm:$0xff]
      %v264 = vld [vmem:[%s262 + $0x8] sm:$0xff]
      %s265 = scalar_lea.vmem [#allocation2], 408
      %266 = vst.msk [vmem:[%s265 + $0x1] sm:$0xff] %vm225, %v263
      %267 = vst.msk [vmem:[%s265 + $0x9] sm:$0xff] %vm225, %v264
      %v268 = vld [vmem:[#allocation2 + $0x1] sm:$0x1]
      %v269 = vld [vmem:[#allocation2 + $0x19] sm:$0x1]
      %v270 = vld [vmem:[#allocation2 + $0x31] sm:$0x1]
      %v271 = vld [vmem:[#allocation2 + $0x49] sm:$0x1]
      %v272 = vld [vmem:[#allocation2 + $0x61] sm:$0x1]
      %v273 = vld [vmem:[#allocation2 + $0x79] sm:$0x1]
      %v274 = vld [vmem:[#allocation2 + $0x91] sm:$0x1]
      %v275 = vld [vmem:[#allocation2 + $0xa9] sm:$0x1]
      %v276 = vld [vmem:[#allocation2 + $0xc1] sm:$0x1]
      %v277 = vld [vmem:[#allocation2 + $0xd9] sm:$0x1]
      %v278 = vld [vmem:[#allocation2 + $0xf1] sm:$0x1]
      %v279 = vld [vmem:[#allocation2 + $0x109] sm:$0x1]
      %v280 = vld [vmem:[#allocation2 + $0x121] sm:$0x1]
      %v281 = vld [vmem:[#allocation2 + $0x139] sm:$0x1]
      %v282 = vld [vmem:[#allocation2 + $0x151] sm:$0x1]
      %v283 = vld [vmem:[#allocation2 + $0x169] sm:$0x1]
      %v284 = vld [vmem:[#allocation2 + $0x181] sm:$0x1]
      %v285 = vld [vmem:[#allocation2 + $0x199] sm:$0x1]
      %vm286 = vcmask 24576
      %287 = vst.msk [vmem:[#allocation2] sm:$0x1] %vm286, %v268
      %288 = vst.msk [vmem:[#allocation2 + $0x18] sm:$0x1] %vm286, %v269
      %289 = vst.msk [vmem:[#allocation2 + $0x30] sm:$0x1] %vm286, %v270
      %290 = vst.msk [vmem:[#allocation2 + $0x48] sm:$0x1] %vm286, %v271
      %291 = vst.msk [vmem:[#allocation2 + $0x60] sm:$0x1] %vm286, %v272
      %292 = vst.msk [vmem:[#allocation2 + $0x78] sm:$0x1] %vm286, %v273
      %293 = vst.msk [vmem:[#allocation2 + $0x90] sm:$0x1] %vm286, %v274
      %294 = vst.msk [vmem:[#allocation2 + $0xa8] sm:$0x1] %vm286, %v275
      %295 = vst.msk [vmem:[#allocation2 + $0xc0] sm:$0x1] %vm286, %v276
      %296 = vst.msk [vmem:[#allocation2 + $0xd8] sm:$0x1] %vm286, %v277
      %297 = vst.msk [vmem:[#allocation2 + $0xf0] sm:$0x1] %vm286, %v278
      %298 = vst.msk [vmem:[#allocation2 + $0x108] sm:$0x1] %vm286, %v279
      %299 = vst.msk [vmem:[#allocation2 + $0x120] sm:$0x1] %vm286, %v280
      %300 = vst.msk [vmem:[#allocation2 + $0x138] sm:$0x1] %vm286, %v281
      %301 = vst.msk [vmem:[#allocation2 + $0x150] sm:$0x1] %vm286, %v282
      %302 = vst.msk [vmem:[#allocation2 + $0x168] sm:$0x1] %vm286, %v283
      %303 = vst.msk [vmem:[#allocation2 + $0x180] sm:$0x1] %vm286, %v284
      %304 = vst.msk [vmem:[#allocation2 + $0x198] sm:$0x1] %vm286, %v285
      %v305 = vld [vmem:[#allocation2 + $0x10] sm:$0x1]
      %v306 = vld [vmem:[#allocation2 + $0x28] sm:$0x1]
      %v307 = vld [vmem:[#allocation2 + $0x40] sm:$0x1]
      %v308 = vld [vmem:[#allocation2 + $0x58] sm:$0x1]
      %v309 = vld [vmem:[#allocation2 + $0x70] sm:$0x1]
      %v310 = vld [vmem:[#allocation2 + $0x88] sm:$0x1]
      %v311 = vld [vmem:[#allocation2 + $0xa0] sm:$0x1]
      %v312 = vld [vmem:[#allocation2 + $0xb8] sm:$0x1]
      %v313 = vld [vmem:[#allocation2 + $0xd0] sm:$0x1]
      %v314 = vld [vmem:[#allocation2 + $0xe8] sm:$0x1]
      %v315 = vld [vmem:[#allocation2 + $0x100] sm:$0x1]
      %v316 = vld [vmem:[#allocation2 + $0x118] sm:$0x1]
      %v317 = vld [vmem:[#allocation2 + $0x130] sm:$0x1]
      %v318 = vld [vmem:[#allocation2 + $0x148] sm:$0x1]
      %v319 = vld [vmem:[#allocation2 + $0x160] sm:$0x1]
      %v320 = vld [vmem:[#allocation2 + $0x178] sm:$0x1]
      %v321 = vld [vmem:[#allocation2 + $0x190] sm:$0x1]
      %v322 = vld [vmem:[#allocation2 + $0x1a8] sm:$0x1]
      %323 = vst.msk [vmem:[#allocation2 + $0x11] sm:$0x1] %vm286, %v305
      %324 = vst.msk [vmem:[#allocation2 + $0x29] sm:$0x1] %vm286, %v306
      %325 = vst.msk [vmem:[#allocation2 + $0x41] sm:$0x1] %vm286, %v307
      %326 = vst.msk [vmem:[#allocation2 + $0x59] sm:$0x1] %vm286, %v308
      %327 = vst.msk [vmem:[#allocation2 + $0x71] sm:$0x1] %vm286, %v309
      %328 = vst.msk [vmem:[#allocation2 + $0x89] sm:$0x1] %vm286, %v310
      %329 = vst.msk [vmem:[#allocation2 + $0xa1] sm:$0x1] %vm286, %v311
      %330 = vst.msk [vmem:[#allocation2 + $0xb9] sm:$0x1] %vm286, %v312
      %331 = vst.msk [vmem:[#allocation2 + $0xd1] sm:$0x1] %vm286, %v313
      %332 = vst.msk [vmem:[#allocation2 + $0xe9] sm:$0x1] %vm286, %v314
      %333 = vst.msk [vmem:[#allocation2 + $0x101] sm:$0x1] %vm286, %v315
      %334 = vst.msk [vmem:[#allocation2 + $0x119] sm:$0x1] %vm286, %v316
      %335 = vst.msk [vmem:[#allocation2 + $0x131] sm:$0x1] %vm286, %v317
      %336 = vst.msk [vmem:[#allocation2 + $0x149] sm:$0x1] %vm286, %v318
      %337 = vst.msk [vmem:[#allocation2 + $0x161] sm:$0x1] %vm286, %v319
      %338 = vst.msk [vmem:[#allocation2 + $0x179] sm:$0x1] %vm286, %v320
      %339 = vst.msk [vmem:[#allocation2 + $0x191] sm:$0x1] %vm286, %v321
      %340 = vst.msk [vmem:[#allocation2 + $0x1a9] sm:$0x1] %vm286, %v322
      %v341 = vld [vmem:[%s183] sm:$0xff]
      %v342 = vld [vmem:[%s183 + $0x8] sm:$0x1]
      %v343 = vld [vmem:[#allocation2] sm:$0xff]
      %v344 = vld [vmem:[#allocation2 + $0x8] sm:$0xff]
      %v345 = vld [vmem:[#allocation2 + $0x18] sm:$0xff]
      %v346 = vld [vmem:[#allocation2 + $0x20] sm:$0xff]
      %v347 = vld [vmem:[#allocation2 + $0x30] sm:$0xff]
      %v348 = vld [vmem:[#allocation2 + $0x38] sm:$0xff]
      %v349 = vld [vmem:[#allocation2 + $0x48] sm:$0xff]
      %v350 = vld [vmem:[#allocation2 + $0x50] sm:$0xff]
      %v351 = vld [vmem:[#allocation2 + $0x60] sm:$0xff]
      %v352 = vld [vmem:[#allocation2 + $0x68] sm:$0xff]
      %v353 = vld [vmem:[#allocation2 + $0x78] sm:$0xff]
      %v354 = vld [vmem:[#allocation2 + $0x80] sm:$0xff]
      %v355 = vld [vmem:[#allocation2 + $0x90] sm:$0xff]
      %v356 = vld [vmem:[#allocation2 + $0x98] sm:$0xff]
      %v357 = vld [vmem:[#allocation2 + $0xa8] sm:$0xff]
      %v358 = vld [vmem:[#allocation2 + $0xb0] sm:$0xff]
      %v359 = vld [vmem:[#allocation2 + $0xc0] sm:$0xff]
      %v360 = vld [vmem:[#allocation2 + $0xc8] sm:$0xff]
      %v361 = vld [vmem:[#allocation2 + $0xd8] sm:$0xff]
      %v362 = vld [vmem:[#allocation2 + $0xe0] sm:$0xff]
      %v363 = vld [vmem:[#allocation2 + $0xf0] sm:$0xff]
      %v364 = vld [vmem:[#allocation2 + $0xf8] sm:$0xff]
      %v365 = vld [vmem:[#allocation2 + $0x108] sm:$0xff]
      %v366 = vld [vmem:[#allocation2 + $0x110] sm:$0xff]
      %v367 = vld [vmem:[#allocation2 + $0x120] sm:$0xff]
      %v368 = vld [vmem:[#allocation2 + $0x128] sm:$0xff]
      %v369 = vld [vmem:[#allocation2 + $0x138] sm:$0xff]
      %v370 = vld [vmem:[#allocation2 + $0x140] sm:$0xff]
      %v371 = vld [vmem:[#allocation2 + $0x150] sm:$0xff]
      %v372 = vld [vmem:[#allocation2 + $0x158] sm:$0xff]
      %v373 = vld [vmem:[#allocation2 + $0x168] sm:$0xff]
      %v374 = vld [vmem:[#allocation2 + $0x170] sm:$0xff]
      %v375 = vperm.slane %v341, 0
      %v376 = vmul.f32 %v343, %v375
      %v377 = vmul.f32 %v344, %v375
      %v378 = vmul.f32 %v345, %v375
      %v379 = vmul.f32 %v346, %v375
      %v380 = vmul.f32 %v347, %v375
      %v381 = vmul.f32 %v348, %v375
      %v382 = vmul.f32 %v349, %v375
      %v383 = vmul.f32 %v350, %v375
      %v384 = vmul.f32 %v351, %v375
      %v385 = vmul.f32 %v352, %v375
      %v386 = vmul.f32 %v353, %v375
      %v387 = vmul.f32 %v354, %v375
      %v388 = vmul.f32 %v355, %v375
      %v389 = vmul.f32 %v356, %v375
      %v390 = vmul.f32 %v357, %v375
      %v391 = vmul.f32 %v358, %v375
      %v392 = vmul.f32 %v359, %v375
      %v393 = vmul.f32 %v360, %v375
      %v394 = vmul.f32 %v361, %v375
      %v395 = vmul.f32 %v362, %v375
      %v396 = vmul.f32 %v363, %v375
      %v397 = vmul.f32 %v364, %v375
      %v398 = vmul.f32 %v365, %v375
      %v399 = vmul.f32 %v366, %v375
      %v400 = vmul.f32 %v367, %v375
      %v401 = vmul.f32 %v368, %v375
      %v402 = vmul.f32 %v369, %v375
      %v403 = vmul.f32 %v370, %v375
      %v404 = vmul.f32 %v371, %v375
      %v405 = vmul.f32 %v372, %v375
      %v406 = vmul.f32 %v373, %v375
      %v407 = vmul.f32 %v374, %v375
      %v408 = vadd.f32 %v376, 0.0
      %v409 = vadd.f32 %v377, 0.0
      %v410 = vadd.f32 %v378, 0.0
      %v411 = vadd.f32 %v379, 0.0
      %v412 = vadd.f32 %v380, 0.0
      %v413 = vadd.f32 %v381, 0.0
      %v414 = vadd.f32 %v382, 0.0
      %v415 = vadd.f32 %v383, 0.0
      %v416 = vadd.f32 %v384, 0.0
      %v417 = vadd.f32 %v385, 0.0
      %v418 = vadd.f32 %v386, 0.0
      %v419 = vadd.f32 %v387, 0.0
      %v420 = vadd.f32 %v388, 0.0
      %v421 = vadd.f32 %v389, 0.0
      %v422 = vadd.f32 %v390, 0.0
      %v423 = vadd.f32 %v391, 0.0
      %v424 = vadd.f32 %v392, 0.0
      %v425 = vadd.f32 %v393, 0.0
      %v426 = vadd.f32 %v394, 0.0
      %v427 = vadd.f32 %v395, 0.0
      %v428 = vadd.f32 %v396, 0.0
      %v429 = vadd.f32 %v397, 0.0
      %v430 = vadd.f32 %v398, 0.0
      %v431 = vadd.f32 %v399, 0.0
      %v432 = vadd.f32 %v400, 0.0
      %v433 = vadd.f32 %v401, 0.0
      %v434 = vadd.f32 %v402, 0.0
      %v435 = vadd.f32 %v403, 0.0
      %v436 = vadd.f32 %v404, 0.0
      %v437 = vadd.f32 %v405, 0.0
      %v438 = vadd.f32 %v406, 0.0
      %v439 = vadd.f32 %v407, 0.0
      %v440 = vld [vmem:[#allocation2 + $0x1] sm:$0xff]
      %v441 = vld [vmem:[#allocation2 + $0x9] sm:$0xff]
      %v442 = vld [vmem:[#allocation2 + $0x19] sm:$0xff]
      %v443 = vld [vmem:[#allocation2 + $0x21] sm:$0xff]
      %v444 = vld [vmem:[#allocation2 + $0x31] sm:$0xff]
      %v445 = vld [vmem:[#allocation2 + $0x39] sm:$0xff]
      %v446 = vld [vmem:[#allocation2 + $0x49] sm:$0xff]
      %v447 = vld [vmem:[#allocation2 + $0x51] sm:$0xff]
      %v448 = vld [vmem:[#allocation2 + $0x61] sm:$0xff]
      %v449 = vld [vmem:[#allocation2 + $0x69] sm:$0xff]
      %v450 = vld [vmem:[#allocation2 + $0x79] sm:$0xff]
      %v451 = vld [vmem:[#allocation2 + $0x81] sm:$0xff]
      %v452 = vld [vmem:[#allocation2 + $0x91] sm:$0xff]
      %v453 = vld [vmem:[#allocation2 + $0x99] sm:$0xff]
      %v454 = vld [vmem:[#allocation2 + $0xa9] sm:$0xff]
      %v455 = vld [vmem:[#allocation2 + $0xb1] sm:$0xff]
      %v456 = vld [vmem:[#allocation2 + $0xc1] sm:$0xff]
      %v457 = vld [vmem:[#allocation2 + $0xc9] sm:$0xff]
      %v458 = vld [vmem:[#allocation2 + $0xd9] sm:$0xff]
      %v459 = vld [vmem:[#allocation2 + $0xe1] sm:$0xff]
      %v460 = vld [vmem:[#allocation2 + $0xf1] sm:$0xff]
      %v461 = vld [vmem:[#allocation2 + $0xf9] sm:$0xff]
      %v462 = vld [vmem:[#allocation2 + $0x109] sm:$0xff]
      %v463 = vld [vmem:[#allocation2 + $0x111] sm:$0xff]
      %v464 = vld [vmem:[#allocation2 + $0x121] sm:$0xff]
      %v465 = vld [vmem:[#allocation2 + $0x129] sm:$0xff]
      %v466 = vld [vmem:[#allocation2 + $0x139] sm:$0xff]
      %v467 = vld [vmem:[#allocation2 + $0x141] sm:$0xff]
      %v468 = vld [vmem:[#allocation2 + $0x151] sm:$0xff]
      %v469 = vld [vmem:[#allocation2 + $0x159] sm:$0xff]
      %v470 = vld [vmem:[#allocation2 + $0x169] sm:$0xff]
      %v471 = vld [vmem:[#allocation2 + $0x171] sm:$0xff]
      %v472 = vperm.slane %v341, 1
      %v473 = vmul.f32 %v440, %v472
      %v474 = vmul.f32 %v441, %v472
      %v475 = vmul.f32 %v442, %v472
      %v476 = vmul.f32 %v443, %v472
      %v477 = vmul.f32 %v444, %v472
      %v478 = vmul.f32 %v445, %v472
      %v479 = vmul.f32 %v446, %v472
      %v480 = vmul.f32 %v447, %v472
      %v481 = vmul.f32 %v448, %v472
      %v482 = vmul.f32 %v449, %v472
      %v483 = vmul.f32 %v450, %v472
      %v484 = vmul.f32 %v451, %v472
      %v485 = vmul.f32 %v452, %v472
      %v486 = vmul.f32 %v453, %v472
      %v487 = vmul.f32 %v454, %v472
      %v488 = vmul.f32 %v455, %v472
      %v489 = vmul.f32 %v456, %v472
      %v490 = vmul.f32 %v457, %v472
      %v491 = vmul.f32 %v458, %v472
      %v492 = vmul.f32 %v459, %v472
      %v493 = vmul.f32 %v460, %v472
      %v494 = vmul.f32 %v461, %v472
      %v495 = vmul.f32 %v462, %v472
      %v496 = vmul.f32 %v463, %v472
      %v497 = vmul.f32 %v464, %v472
      %v498 = vmul.f32 %v465, %v472
      %v499 = vmul.f32 %v466, %v472
      %v500 = vmul.f32 %v467, %v472
      %v501 = vmul.f32 %v468, %v472
      %v502 = vmul.f32 %v469, %v472
      %v503 = vmul.f32 %v470, %v472
      %v504 = vmul.f32 %v471, %v472
      %v505 = vadd.f32 %v408, %v473
      %v506 = vadd.f32 %v409, %v474
      %v507 = vadd.f32 %v410, %v475
      %v508 = vadd.f32 %v411, %v476
      %v509 = vadd.f32 %v412, %v477
      %v510 = vadd.f32 %v413, %v478
      %v511 = vadd.f32 %v414, %v479
      %v512 = vadd.f32 %v415, %v480
      %v513 = vadd.f32 %v416, %v481
      %v514 = vadd.f32 %v417, %v482
      %v515 = vadd.f32 %v418, %v483
      %v516 = vadd.f32 %v419, %v484
      %v517 = vadd.f32 %v420, %v485
      %v518 = vadd.f32 %v421, %v486
      %v519 = vadd.f32 %v422, %v487
      %v520 = vadd.f32 %v423, %v488
      %v521 = vadd.f32 %v424, %v489
      %v522 = vadd.f32 %v425, %v490
      %v523 = vadd.f32 %v426, %v491
      %v524 = vadd.f32 %v427, %v492
      %v525 = vadd.f32 %v428, %v493
      %v526 = vadd.f32 %v429, %v494
      %v527 = vadd.f32 %v430, %v495
      %v528 = vadd.f32 %v431, %v496
      %v529 = vadd.f32 %v432, %v497
      %v530 = vadd.f32 %v433, %v498
      %v531 = vadd.f32 %v434, %v499
      %v532 = vadd.f32 %v435, %v500
      %v533 = vadd.f32 %v436, %v501
      %v534 = vadd.f32 %v437, %v502
      %v535 = vadd.f32 %v438, %v503
      %v536 = vadd.f32 %v439, %v504
      %v537 = vld [vmem:[#allocation2 + $0x2] sm:$0xff]
      %v538 = vld [vmem:[#allocation2 + $0xa] sm:$0xff]
      %v539 = vld [vmem:[#allocation2 + $0x1a] sm:$0xff]
      %v540 = vld [vmem:[#allocation2 + $0x22] sm:$0xff]
      %v541 = vld [vmem:[#allocation2 + $0x32] sm:$0xff]
      %v542 = vld [vmem:[#allocation2 + $0x3a] sm:$0xff]
      %v543 = vld [vmem:[#allocation2 + $0x4a] sm:$0xff]
      %v544 = vld [vmem:[#allocation2 + $0x52] sm:$0xff]
      %v545 = vld [vmem:[#allocation2 + $0x62] sm:$0xff]
      %v546 = vld [vmem:[#allocation2 + $0x6a] sm:$0xff]
      %v547 = vld [vmem:[#allocation2 + $0x7a] sm:$0xff]
      %v548 = vld [vmem:[#allocation2 + $0x82] sm:$0xff]
      %v549 = vld [vmem:[#allocation2 + $0x92] sm:$0xff]
      %v550 = vld [vmem:[#allocation2 + $0x9a] sm:$0xff]
      %v551 = vld [vmem:[#allocation2 + $0xaa] sm:$0xff]
      %v552 = vld [vmem:[#allocation2 + $0xb2] sm:$0xff]
      %v553 = vld [vmem:[#allocation2 + $0xc2] sm:$0xff]
      %v554 = vld [vmem:[#allocation2 + $0xca] sm:$0xff]
      %v555 = vld [vmem:[#allocation2 + $0xda] sm:$0xff]
      %v556 = vld [vmem:[#allocation2 + $0xe2] sm:$0xff]
      %v557 = vld [vmem:[#allocation2 + $0xf2] sm:$0xff]
      %v558 = vld [vmem:[#allocation2 + $0xfa] sm:$0xff]
      %v559 = vld [vmem:[#allocation2 + $0x10a] sm:$0xff]
      %v560 = vld [vmem:[#allocation2 + $0x112] sm:$0xff]
      %v561 = vld [vmem:[#allocation2 + $0x122] sm:$0xff]
      %v562 = vld [vmem:[#allocation2 + $0x12a] sm:$0xff]
      %v563 = vld [vmem:[#allocation2 + $0x13a] sm:$0xff]
      %v564 = vld [vmem:[#allocation2 + $0x142] sm:$0xff]
      %v565 = vld [vmem:[#allocation2 + $0x152] sm:$0xff]
      %v566 = vld [vmem:[#allocation2 + $0x15a] sm:$0xff]
      %v567 = vld [vmem:[#allocation2 + $0x16a] sm:$0xff]
      %v568 = vld [vmem:[#allocation2 + $0x172] sm:$0xff]
      %v569 = vperm.slane %v341, 2
      %v570 = vmul.f32 %v537, %v569
      %v571 = vmul.f32 %v538, %v569
      %v572 = vmul.f32 %v539, %v569
      %v573 = vmul.f32 %v540, %v569
      %v574 = vmul.f32 %v541, %v569
      %v575 = vmul.f32 %v542, %v569
      %v576 = vmul.f32 %v543, %v569
      %v577 = vmul.f32 %v544, %v569
      %v578 = vmul.f32 %v545, %v569
      %v579 = vmul.f32 %v546, %v569
      %v580 = vmul.f32 %v547, %v569
      %v581 = vmul.f32 %v548, %v569
      %v582 = vmul.f32 %v549, %v569
      %v583 = vmul.f32 %v550, %v569
      %v584 = vmul.f32 %v551, %v569
      %v585 = vmul.f32 %v552, %v569
      %v586 = vmul.f32 %v553, %v569
      %v587 = vmul.f32 %v554, %v569
      %v588 = vmul.f32 %v555, %v569
      %v589 = vmul.f32 %v556, %v569
      %v590 = vmul.f32 %v557, %v569
      %v591 = vmul.f32 %v558, %v569
      %v592 = vmul.f32 %v559, %v569
      %v593 = vmul.f32 %v560, %v569
      %v594 = vmul.f32 %v561, %v569
      %v595 = vmul.f32 %v562, %v569
      %v596 = vmul.f32 %v563, %v569
      %v597 = vmul.f32 %v564, %v569
      %v598 = vmul.f32 %v565, %v569
      %v599 = vmul.f32 %v566, %v569
      %v600 = vmul.f32 %v567, %v569
      %v601 = vmul.f32 %v568, %v569
      %v602 = vadd.f32 %v505, %v570
      %v603 = vadd.f32 %v506, %v571
      %v604 = vadd.f32 %v507, %v572
      %v605 = vadd.f32 %v508, %v573
      %v606 = vadd.f32 %v509, %v574
      %v607 = vadd.f32 %v510, %v575
      %v608 = vadd.f32 %v511, %v576
      %v609 = vadd.f32 %v512, %v577
      %v610 = vadd.f32 %v513, %v578
      %v611 = vadd.f32 %v514, %v579
      %v612 = vadd.f32 %v515, %v580
      %v613 = vadd.f32 %v516, %v581
      %v614 = vadd.f32 %v517, %v582
      %v615 = vadd.f32 %v518, %v583
      %v616 = vadd.f32 %v519, %v584
      %v617 = vadd.f32 %v520, %v585
      %v618 = vadd.f32 %v521, %v586
      %v619 = vadd.f32 %v522, %v587
      %v620 = vadd.f32 %v523, %v588
      %v621 = vadd.f32 %v524, %v589
      %v622 = vadd.f32 %v525, %v590
      %v623 = vadd.f32 %v526, %v591
      %v624 = vadd.f32 %v527, %v592
      %v625 = vadd.f32 %v528, %v593
      %v626 = vadd.f32 %v529, %v594
      %v627 = vadd.f32 %v530, %v595
      %v628 = vadd.f32 %v531, %v596
      %v629 = vadd.f32 %v532, %v597
      %v630 = vadd.f32 %v533, %v598
      %v631 = vadd.f32 %v534, %v599
      %v632 = vadd.f32 %v535, %v600
      %v633 = vadd.f32 %v536, %v601
      %v634 = vld [vmem:[%s224] sm:$0xff]
      %v635 = vld [vmem:[%s224 + $0x8] sm:$0xff]
      %v636 = vld [vmem:[%s224 + $0x18] sm:$0xff]
      %v637 = vld [vmem:[%s224 + $0x20] sm:$0xff]
      %v638 = vld [vmem:[%s224 + $0x30] sm:$0xff]
      %v639 = vld [vmem:[%s224 + $0x38] sm:$0xff]
      %v640 = vld [vmem:[%s224 + $0x48] sm:$0xff]
      %v641 = vld [vmem:[%s224 + $0x50] sm:$0xff]
      %v642 = vld [vmem:[%s224 + $0x60] sm:$0xff]
      %v643 = vld [vmem:[%s224 + $0x68] sm:$0xff]
      %v644 = vld [vmem:[%s224 + $0x78] sm:$0xff]
      %v645 = vld [vmem:[%s224 + $0x80] sm:$0xff]
      %v646 = vld [vmem:[%s224 + $0x90] sm:$0xff]
      %v647 = vld [vmem:[%s224 + $0x98] sm:$0xff]
      %v648 = vld [vmem:[%s224 + $0xa8] sm:$0xff]
      %v649 = vld [vmem:[%s224 + $0xb0] sm:$0xff]
      %v650 = vld [vmem:[%s224 + $0xc0] sm:$0xff]
      %v651 = vld [vmem:[%s224 + $0xc8] sm:$0xff]
      %v652 = vld [vmem:[%s224 + $0xd8] sm:$0xff]
      %v653 = vld [vmem:[%s224 + $0xe0] sm:$0xff]
      %v654 = vld [vmem:[%s224 + $0xf0] sm:$0xff]
      %v655 = vld [vmem:[%s224 + $0xf8] sm:$0xff]
      %v656 = vld [vmem:[%s224 + $0x108] sm:$0xff]
      %v657 = vld [vmem:[%s224 + $0x110] sm:$0xff]
      %v658 = vld [vmem:[%s224 + $0x120] sm:$0xff]
      %v659 = vld [vmem:[%s224 + $0x128] sm:$0xff]
      %v660 = vld [vmem:[%s224 + $0x138] sm:$0xff]
      %v661 = vld [vmem:[%s224 + $0x140] sm:$0xff]
      %v662 = vld [vmem:[%s224 + $0x150] sm:$0xff]
      %v663 = vld [vmem:[%s224 + $0x158] sm:$0xff]
      %v664 = vld [vmem:[%s224 + $0x168] sm:$0xff]
      %v665 = vld [vmem:[%s224 + $0x170] sm:$0xff]
      %v666 = vperm.slane %v341, 3
      %v667 = vmul.f32 %v634, %v666
      %v668 = vmul.f32 %v635, %v666
      %v669 = vmul.f32 %v636, %v666
      %v670 = vmul.f32 %v637, %v666
      %v671 = vmul.f32 %v638, %v666
      %v672 = vmul.f32 %v639, %v666
      %v673 = vmul.f32 %v640, %v666
      %v674 = vmul.f32 %v641, %v666
      %v675 = vmul.f32 %v642, %v666
      %v676 = vmul.f32 %v643, %v666
      %v677 = vmul.f32 %v644, %v666
      %v678 = vmul.f32 %v645, %v666
      %v679 = vmul.f32 %v646, %v666
      %v680 = vmul.f32 %v647, %v666
      %v681 = vmul.f32 %v648, %v666
      %v682 = vmul.f32 %v649, %v666
      %v683 = vmul.f32 %v650, %v666
      %v684 = vmul.f32 %v651, %v666
      %v685 = vmul.f32 %v652, %v666
      %v686 = vmul.f32 %v653, %v666
      %v687 = vmul.f32 %v654, %v666
      %v688 = vmul.f32 %v655, %v666
      %v689 = vmul.f32 %v656, %v666
      %v690 = vmul.f32 %v657, %v666
      %v691 = vmul.f32 %v658, %v666
      %v692 = vmul.f32 %v659, %v666
      %v693 = vmul.f32 %v660, %v666
      %v694 = vmul.f32 %v661, %v666
      %v695 = vmul.f32 %v662, %v666
      %v696 = vmul.f32 %v663, %v666
      %v697 = vmul.f32 %v664, %v666
      %v698 = vmul.f32 %v665, %v666
      %v699 = vadd.f32 %v602, %v667
      %v700 = vadd.f32 %v603, %v668
      %v701 = vadd.f32 %v604, %v669
      %v702 = vadd.f32 %v605, %v670
      %v703 = vadd.f32 %v606, %v671
      %v704 = vadd.f32 %v607, %v672
      %v705 = vadd.f32 %v608, %v673
      %v706 = vadd.f32 %v609, %v674
      %v707 = vadd.f32 %v610, %v675
      %v708 = vadd.f32 %v611, %v676
      %v709 = vadd.f32 %v612, %v677
      %v710 = vadd.f32 %v613, %v678
      %v711 = vadd.f32 %v614, %v679
      %v712 = vadd.f32 %v615, %v680
      %v713 = vadd.f32 %v616, %v681
      %v714 = vadd.f32 %v617, %v682
      %v715 = vadd.f32 %v618, %v683
      %v716 = vadd.f32 %v619, %v684
      %v717 = vadd.f32 %v620, %v685
      %v718 = vadd.f32 %v621, %v686
      %v719 = vadd.f32 %v622, %v687
      %v720 = vadd.f32 %v623, %v688
      %v721 = vadd.f32 %v624, %v689
      %v722 = vadd.f32 %v625, %v690
      %v723 = vadd.f32 %v626, %v691
      %v724 = vadd.f32 %v627, %v692
      %v725 = vadd.f32 %v628, %v693
      %v726 = vadd.f32 %v629, %v694
      %v727 = vadd.f32 %v630, %v695
      %v728 = vadd.f32 %v631, %v696
      %v729 = vadd.f32 %v632, %v697
      %v730 = vadd.f32 %v633, %v698
      %v731 = vld [vmem:[%s224 + $0x1] sm:$0xff]
      %v732 = vld [vmem:[%s224 + $0x9] sm:$0xff]
      %v733 = vld [vmem:[%s224 + $0x19] sm:$0xff]
      %v734 = vld [vmem:[%s224 + $0x21] sm:$0xff]
      %v735 = vld [vmem:[%s224 + $0x31] sm:$0xff]
      %v736 = vld [vmem:[%s224 + $0x39] sm:$0xff]
      %v737 = vld [vmem:[%s224 + $0x49] sm:$0xff]
      %v738 = vld [vmem:[%s224 + $0x51] sm:$0xff]
      %v739 = vld [vmem:[%s224 + $0x61] sm:$0xff]
      %v740 = vld [vmem:[%s224 + $0x69] sm:$0xff]
      %v741 = vld [vmem:[%s224 + $0x79] sm:$0xff]
      %v742 = vld [vmem:[%s224 + $0x81] sm:$0xff]
      %v743 = vld [vmem:[%s224 + $0x91] sm:$0xff]
      %v744 = vld [vmem:[%s224 + $0x99] sm:$0xff]
      %v745 = vld [vmem:[%s224 + $0xa9] sm:$0xff]
      %v746 = vld [vmem:[%s224 + $0xb1] sm:$0xff]
      %v747 = vld [vmem:[%s224 + $0xc1] sm:$0xff]
      %v748 = vld [vmem:[%s224 + $0xc9] sm:$0xff]
      %v749 = vld [vmem:[%s224 + $0xd9] sm:$0xff]
      %v750 = vld [vmem:[%s224 + $0xe1] sm:$0xff]
      %v751 = vld [vmem:[%s224 + $0xf1] sm:$0xff]
      %v752 = vld [vmem:[%s224 + $0xf9] sm:$0xff]
      %v753 = vld [vmem:[%s224 + $0x109] sm:$0xff]
      %v754 = vld [vmem:[%s224 + $0x111] sm:$0xff]
      %v755 = vld [vmem:[%s224 + $0x121] sm:$0xff]
      %v756 = vld [vmem:[%s224 + $0x129] sm:$0xff]
      %v757 = vld [vmem:[%s224 + $0x139] sm:$0xff]
      %v758 = vld [vmem:[%s224 + $0x141] sm:$0xff]
      %v759 = vld [vmem:[%s224 + $0x151] sm:$0xff]
      %v760 = vld [vmem:[%s224 + $0x159] sm:$0xff]
      %v761 = vld [vmem:[%s224 + $0x169] sm:$0xff]
      %v762 = vld [vmem:[%s224 + $0x171] sm:$0xff]
      %v763 = vperm.slane %v341, 4
      %v764 = vmul.f32 %v731, %v763
      %v765 = vmul.f32 %v732, %v763
      %v766 = vmul.f32 %v733, %v763
      %v767 = vmul.f32 %v734, %v763
      %v768 = vmul.f32 %v735, %v763
      %v769 = vmul.f32 %v736, %v763
      %v770 = vmul.f32 %v737, %v763
      %v771 = vmul.f32 %v738, %v763
      %v772 = vmul.f32 %v739, %v763
      %v773 = vmul.f32 %v740, %v763
      %v774 = vmul.f32 %v741, %v763
      %v775 = vmul.f32 %v742, %v763
      %v776 = vmul.f32 %v743, %v763
      %v777 = vmul.f32 %v744, %v763
      %v778 = vmul.f32 %v745, %v763
      %v779 = vmul.f32 %v746, %v763
      %v780 = vmul.f32 %v747, %v763
      %v781 = vmul.f32 %v748, %v763
      %v782 = vmul.f32 %v749, %v763
      %v783 = vmul.f32 %v750, %v763
      %v784 = vmul.f32 %v751, %v763
      %v785 = vmul.f32 %v752, %v763
      %v786 = vmul.f32 %v753, %v763
      %v787 = vmul.f32 %v754, %v763
      %v788 = vmul.f32 %v755, %v763
      %v789 = vmul.f32 %v756, %v763
      %v790 = vmul.f32 %v757, %v763
      %v791 = vmul.f32 %v758, %v763
      %v792 = vmul.f32 %v759, %v763
      %v793 = vmul.f32 %v760, %v763
      %v794 = vmul.f32 %v761, %v763
      %v795 = vmul.f32 %v762, %v763
      %v796 = vadd.f32 %v699, %v764
      %v797 = vadd.f32 %v700, %v765
      %v798 = vadd.f32 %v701, %v766
      %v799 = vadd.f32 %v702, %v767
      %v800 = vadd.f32 %v703, %v768
      %v801 = vadd.f32 %v704, %v769
      %v802 = vadd.f32 %v705, %v770
      %v803 = vadd.f32 %v706, %v771
      %v804 = vadd.f32 %v707, %v772
      %v805 = vadd.f32 %v708, %v773
      %v806 = vadd.f32 %v709, %v774
      %v807 = vadd.f32 %v710, %v775
      %v808 = vadd.f32 %v711, %v776
      %v809 = vadd.f32 %v712, %v777
      %v810 = vadd.f32 %v713, %v778
      %v811 = vadd.f32 %v714, %v779
      %v812 = vadd.f32 %v715, %v780
      %v813 = vadd.f32 %v716, %v781
      %v814 = vadd.f32 %v717, %v782
      %v815 = vadd.f32 %v718, %v783
      %v816 = vadd.f32 %v719, %v784
      %v817 = vadd.f32 %v720, %v785
      %v818 = vadd.f32 %v721, %v786
      %v819 = vadd.f32 %v722, %v787
      %v820 = vadd.f32 %v723, %v788
      %v821 = vadd.f32 %v724, %v789
      %v822 = vadd.f32 %v725, %v790
      %v823 = vadd.f32 %v726, %v791
      %v824 = vadd.f32 %v727, %v792
      %v825 = vadd.f32 %v728, %v793
      %v826 = vadd.f32 %v729, %v794
      %v827 = vadd.f32 %v730, %v795
      %v828 = vld [vmem:[%s224 + $0x2] sm:$0xff]
      %v829 = vld [vmem:[%s224 + $0xa] sm:$0xff]
      %v830 = vld [vmem:[%s224 + $0x1a] sm:$0xff]
      %v831 = vld [vmem:[%s224 + $0x22] sm:$0xff]
      %v832 = vld [vmem:[%s224 + $0x32] sm:$0xff]
      %v833 = vld [vmem:[%s224 + $0x3a] sm:$0xff]
      %v834 = vld [vmem:[%s224 + $0x4a] sm:$0xff]
      %v835 = vld [vmem:[%s224 + $0x52] sm:$0xff]
      %v836 = vld [vmem:[%s224 + $0x62] sm:$0xff]
      %v837 = vld [vmem:[%s224 + $0x6a] sm:$0xff]
      %v838 = vld [vmem:[%s224 + $0x7a] sm:$0xff]
      %v839 = vld [vmem:[%s224 + $0x82] sm:$0xff]
      %v840 = vld [vmem:[%s224 + $0x92] sm:$0xff]
      %v841 = vld [vmem:[%s224 + $0x9a] sm:$0xff]
      %v842 = vld [vmem:[%s224 + $0xaa] sm:$0xff]
      %v843 = vld [vmem:[%s224 + $0xb2] sm:$0xff]
      %v844 = vld [vmem:[%s224 + $0xc2] sm:$0xff]
      %v845 = vld [vmem:[%s224 + $0xca] sm:$0xff]
      %v846 = vld [vmem:[%s224 + $0xda] sm:$0xff]
      %v847 = vld [vmem:[%s224 + $0xe2] sm:$0xff]
      %v848 = vld [vmem:[%s224 + $0xf2] sm:$0xff]
      %v849 = vld [vmem:[%s224 + $0xfa] sm:$0xff]
      %v850 = vld [vmem:[%s224 + $0x10a] sm:$0xff]
      %v851 = vld [vmem:[%s224 + $0x112] sm:$0xff]
      %v852 = vld [vmem:[%s224 + $0x122] sm:$0xff]
      %v853 = vld [vmem:[%s224 + $0x12a] sm:$0xff]
      %v854 = vld [vmem:[%s224 + $0x13a] sm:$0xff]
      %v855 = vld [vmem:[%s224 + $0x142] sm:$0xff]
      %v856 = vld [vmem:[%s224 + $0x152] sm:$0xff]
      %v857 = vld [vmem:[%s224 + $0x15a] sm:$0xff]
      %v858 = vld [vmem:[%s224 + $0x16a] sm:$0xff]
      %v859 = vld [vmem:[%s224 + $0x172] sm:$0xff]
      %v860 = vperm.slane %v341, 5
      %v861 = vmul.f32 %v828, %v860
      %v862 = vmul.f32 %v829, %v860
      %v863 = vmul.f32 %v830, %v860
      %v864 = vmul.f32 %v831, %v860
      %v865 = vmul.f32 %v832, %v860
      %v866 = vmul.f32 %v833, %v860
      %v867 = vmul.f32 %v834, %v860
      %v868 = vmul.f32 %v835, %v860
      %v869 = vmul.f32 %v836, %v860
      %v870 = vmul.f32 %v837, %v860
      %v871 = vmul.f32 %v838, %v860
      %v872 = vmul.f32 %v839, %v860
      %v873 = vmul.f32 %v840, %v860
      %v874 = vmul.f32 %v841, %v860
      %v875 = vmul.f32 %v842, %v860
      %v876 = vmul.f32 %v843, %v860
      %v877 = vmul.f32 %v844, %v860
      %v878 = vmul.f32 %v845, %v860
      %v879 = vmul.f32 %v846, %v860
      %v880 = vmul.f32 %v847, %v860
      %v881 = vmul.f32 %v848, %v860
      %v882 = vmul.f32 %v849, %v860
      %v883 = vmul.f32 %v850, %v860
      %v884 = vmul.f32 %v851, %v860
      %v885 = vmul.f32 %v852, %v860
      %v886 = vmul.f32 %v853, %v860
      %v887 = vmul.f32 %v854, %v860
      %v888 = vmul.f32 %v855, %v860
      %v889 = vmul.f32 %v856, %v860
      %v890 = vmul.f32 %v857, %v860
      %v891 = vmul.f32 %v858, %v860
      %v892 = vmul.f32 %v859, %v860
      %v893 = vadd.f32 %v796, %v861
      %v894 = vadd.f32 %v797, %v862
      %v895 = vadd.f32 %v798, %v863
      %v896 = vadd.f32 %v799, %v864
      %v897 = vadd.f32 %v800, %v865
      %v898 = vadd.f32 %v801, %v866
      %v899 = vadd.f32 %v802, %v867
      %v900 = vadd.f32 %v803, %v868
      %v901 = vadd.f32 %v804, %v869
      %v902 = vadd.f32 %v805, %v870
      %v903 = vadd.f32 %v806, %v871
      %v904 = vadd.f32 %v807, %v872
      %v905 = vadd.f32 %v808, %v873
      %v906 = vadd.f32 %v809, %v874
      %v907 = vadd.f32 %v810, %v875
      %v908 = vadd.f32 %v811, %v876
      %v909 = vadd.f32 %v812, %v877
      %v910 = vadd.f32 %v813, %v878
      %v911 = vadd.f32 %v814, %v879
      %v912 = vadd.f32 %v815, %v880
      %v913 = vadd.f32 %v816, %v881
      %v914 = vadd.f32 %v817, %v882
      %v915 = vadd.f32 %v818, %v883
      %v916 = vadd.f32 %v819, %v884
      %v917 = vadd.f32 %v820, %v885
      %v918 = vadd.f32 %v821, %v886
      %v919 = vadd.f32 %v822, %v887
      %v920 = vadd.f32 %v823, %v888
      %v921 = vadd.f32 %v824, %v889
      %v922 = vadd.f32 %v825, %v890
      %v923 = vadd.f32 %v826, %v891
      %v924 = vadd.f32 %v827, %v892
      %s925 = scalar_lea.vmem [#allocation2], 48
      %v926 = vld [vmem:[%s925] sm:$0xff]
      %v927 = vld [vmem:[%s925 + $0x8] sm:$0xff]
      %v928 = vld [vmem:[%s925 + $0x18] sm:$0xff]
      %v929 = vld [vmem:[%s925 + $0x20] sm:$0xff]
      %v930 = vld [vmem:[%s925 + $0x30] sm:$0xff]
      %v931 = vld [vmem:[%s925 + $0x38] sm:$0xff]
      %v932 = vld [vmem:[%s925 + $0x48] sm:$0xff]
      %v933 = vld [vmem:[%s925 + $0x50] sm:$0xff]
      %v934 = vld [vmem:[%s925 + $0x60] sm:$0xff]
      %v935 = vld [vmem:[%s925 + $0x68] sm:$0xff]
      %v936 = vld [vmem:[%s925 + $0x78] sm:$0xff]
      %v937 = vld [vmem:[%s925 + $0x80] sm:$0xff]
      %v938 = vld [vmem:[%s925 + $0x90] sm:$0xff]
      %v939 = vld [vmem:[%s925 + $0x98] sm:$0xff]
      %v940 = vld [vmem:[%s925 + $0xa8] sm:$0xff]
      %v941 = vld [vmem:[%s925 + $0xb0] sm:$0xff]
      %v942 = vld [vmem:[%s925 + $0xc0] sm:$0xff]
      %v943 = vld [vmem:[%s925 + $0xc8] sm:$0xff]
      %v944 = vld [vmem:[%s925 + $0xd8] sm:$0xff]
      %v945 = vld [vmem:[%s925 + $0xe0] sm:$0xff]
      %v946 = vld [vmem:[%s925 + $0xf0] sm:$0xff]
      %v947 = vld [vmem:[%s925 + $0xf8] sm:$0xff]
      %v948 = vld [vmem:[%s925 + $0x108] sm:$0xff]
      %v949 = vld [vmem:[%s925 + $0x110] sm:$0xff]
      %v950 = vld [vmem:[%s925 + $0x120] sm:$0xff]
      %v951 = vld [vmem:[%s925 + $0x128] sm:$0xff]
      %v952 = vld [vmem:[%s925 + $0x138] sm:$0xff]
      %v953 = vld [vmem:[%s925 + $0x140] sm:$0xff]
      %v954 = vld [vmem:[%s925 + $0x150] sm:$0xff]
      %v955 = vld [vmem:[%s925 + $0x158] sm:$0xff]
      %v956 = vld [vmem:[%s925 + $0x168] sm:$0xff]
      %v957 = vld [vmem:[%s925 + $0x170] sm:$0xff]
      %v958 = vperm.slane %v341, 6
      %v959 = vmul.f32 %v926, %v958
      %v960 = vmul.f32 %v927, %v958
      %v961 = vmul.f32 %v928, %v958
      %v962 = vmul.f32 %v929, %v958
      %v963 = vmul.f32 %v930, %v958
      %v964 = vmul.f32 %v931, %v958
      %v965 = vmul.f32 %v932, %v958
      %v966 = vmul.f32 %v933, %v958
      %v967 = vmul.f32 %v934, %v958
      %v968 = vmul.f32 %v935, %v958
      %v969 = vmul.f32 %v936, %v958
      %v970 = vmul.f32 %v937, %v958
      %v971 = vmul.f32 %v938, %v958
      %v972 = vmul.f32 %v939, %v958
      %v973 = vmul.f32 %v940, %v958
      %v974 = vmul.f32 %v941, %v958
      %v975 = vmul.f32 %v942, %v958
      %v976 = vmul.f32 %v943, %v958
      %v977 = vmul.f32 %v944, %v958
      %v978 = vmul.f32 %v945, %v958
      %v979 = vmul.f32 %v946, %v958
      %v980 = vmul.f32 %v947, %v958
      %v981 = vmul.f32 %v948, %v958
      %v982 = vmul.f32 %v949, %v958
      %v983 = vmul.f32 %v950, %v958
      %v984 = vmul.f32 %v951, %v958
      %v985 = vmul.f32 %v952, %v958
      %v986 = vmul.f32 %v953, %v958
      %v987 = vmul.f32 %v954, %v958
      %v988 = vmul.f32 %v955, %v958
      %v989 = vmul.f32 %v956, %v958
      %v990 = vmul.f32 %v957, %v958
      %v991 = vadd.f32 %v893, %v959
      %v992 = vadd.f32 %v894, %v960
      %v993 = vadd.f32 %v895, %v961
      %v994 = vadd.f32 %v896, %v962
      %v995 = vadd.f32 %v897, %v963
      %v996 = vadd.f32 %v898, %v964
      %v997 = vadd.f32 %v899, %v965
      %v998 = vadd.f32 %v900, %v966
      %v999 = vadd.f32 %v901, %v967
      %v1000 = vadd.f32 %v902, %v968
      %v1001 = vadd.f32 %v903, %v969
      %v1002 = vadd.f32 %v904, %v970
      %v1003 = vadd.f32 %v905, %v971
      %v1004 = vadd.f32 %v906, %v972
      %v1005 = vadd.f32 %v907, %v973
      %v1006 = vadd.f32 %v908, %v974
      %v1007 = vadd.f32 %v909, %v975
      %v1008 = vadd.f32 %v910, %v976
      %v1009 = vadd.f32 %v911, %v977
      %v1010 = vadd.f32 %v912, %v978
      %v1011 = vadd.f32 %v913, %v979
      %v1012 = vadd.f32 %v914, %v980
      %v1013 = vadd.f32 %v915, %v981
      %v1014 = vadd.f32 %v916, %v982
      %v1015 = vadd.f32 %v917, %v983
      %v1016 = vadd.f32 %v918, %v984
      %v1017 = vadd.f32 %v919, %v985
      %v1018 = vadd.f32 %v920, %v986
      %v1019 = vadd.f32 %v921, %v987
      %v1020 = vadd.f32 %v922, %v988
      %v1021 = vadd.f32 %v923, %v989
      %v1022 = vadd.f32 %v924, %v990
      %v1023 = vld [vmem:[%s925 + $0x1] sm:$0xff]
      %v1024 = vld [vmem:[%s925 + $0x9] sm:$0xff]
      %v1025 = vld [vmem:[%s925 + $0x19] sm:$0xff]
      %v1026 = vld [vmem:[%s925 + $0x21] sm:$0xff]
      %v1027 = vld [vmem:[%s925 + $0x31] sm:$0xff]
      %v1028 = vld [vmem:[%s925 + $0x39] sm:$0xff]
      %v1029 = vld [vmem:[%s925 + $0x49] sm:$0xff]
      %v1030 = vld [vmem:[%s925 + $0x51] sm:$0xff]
      %v1031 = vld [vmem:[%s925 + $0x61] sm:$0xff]
      %v1032 = vld [vmem:[%s925 + $0x69] sm:$0xff]
      %v1033 = vld [vmem:[%s925 + $0x79] sm:$0xff]
      %v1034 = vld [vmem:[%s925 + $0x81] sm:$0xff]
      %v1035 = vld [vmem:[%s925 + $0x91] sm:$0xff]
      %v1036 = vld [vmem:[%s925 + $0x99] sm:$0xff]
      %v1037 = vld [vmem:[%s925 + $0xa9] sm:$0xff]
      %v1038 = vld [vmem:[%s925 + $0xb1] sm:$0xff]
      %v1039 = vld [vmem:[%s925 + $0xc1] sm:$0xff]
      %v1040 = vld [vmem:[%s925 + $0xc9] sm:$0xff]
      %v1041 = vld [vmem:[%s925 + $0xd9] sm:$0xff]
      %v1042 = vld [vmem:[%s925 + $0xe1] sm:$0xff]
      %v1043 = vld [vmem:[%s925 + $0xf1] sm:$0xff]
      %v1044 = vld [vmem:[%s925 + $0xf9] sm:$0xff]
      %v1045 = vld [vmem:[%s925 + $0x109] sm:$0xff]
      %v1046 = vld [vmem:[%s925 + $0x111] sm:$0xff]
      %v1047 = vld [vmem:[%s925 + $0x121] sm:$0xff]
      %v1048 = vld [vmem:[%s925 + $0x129] sm:$0xff]
      %v1049 = vld [vmem:[%s925 + $0x139] sm:$0xff]
      %v1050 = vld [vmem:[%s925 + $0x141] sm:$0xff]
      %v1051 = vld [vmem:[%s925 + $0x151] sm:$0xff]
      %v1052 = vld [vmem:[%s925 + $0x159] sm:$0xff]
      %v1053 = vld [vmem:[%s925 + $0x169] sm:$0xff]
      %v1054 = vld [vmem:[%s925 + $0x171] sm:$0xff]
      %v1055 = vperm.slane %v341, 7
      %v1056 = vmul.f32 %v1023, %v1055
      %v1057 = vmul.f32 %v1024, %v1055
      %v1058 = vmul.f32 %v1025, %v1055
      %v1059 = vmul.f32 %v1026, %v1055
      %v1060 = vmul.f32 %v1027, %v1055
      %v1061 = vmul.f32 %v1028, %v1055
      %v1062 = vmul.f32 %v1029, %v1055
      %v1063 = vmul.f32 %v1030, %v1055
      %v1064 = vmul.f32 %v1031, %v1055
      %v1065 = vmul.f32 %v1032, %v1055
      %v1066 = vmul.f32 %v1033, %v1055
      %v1067 = vmul.f32 %v1034, %v1055
      %v1068 = vmul.f32 %v1035, %v1055
      %v1069 = vmul.f32 %v1036, %v1055
      %v1070 = vmul.f32 %v1037, %v1055
      %v1071 = vmul.f32 %v1038, %v1055
      %v1072 = vmul.f32 %v1039, %v1055
      %v1073 = vmul.f32 %v1040, %v1055
      %v1074 = vmul.f32 %v1041, %v1055
      %v1075 = vmul.f32 %v1042, %v1055
      %v1076 = vmul.f32 %v1043, %v1055
      %v1077 = vmul.f32 %v1044, %v1055
      %v1078 = vmul.f32 %v1045, %v1055
      %v1079 = vmul.f32 %v1046, %v1055
      %v1080 = vmul.f32 %v1047, %v1055
      %v1081 = vmul.f32 %v1048, %v1055
      %v1082 = vmul.f32 %v1049, %v1055
      %v1083 = vmul.f32 %v1050, %v1055
      %v1084 = vmul.f32 %v1051, %v1055
      %v1085 = vmul.f32 %v1052, %v1055
      %v1086 = vmul.f32 %v1053, %v1055
      %v1087 = vmul.f32 %v1054, %v1055
      %v1088 = vadd.f32 %v991, %v1056
      %v1089 = vadd.f32 %v992, %v1057
      %v1090 = vadd.f32 %v993, %v1058
      %v1091 = vadd.f32 %v994, %v1059
      %v1092 = vadd.f32 %v995, %v1060
      %v1093 = vadd.f32 %v996, %v1061
      %v1094 = vadd.f32 %v997, %v1062
      %v1095 = vadd.f32 %v998, %v1063
      %v1096 = vadd.f32 %v999, %v1064
      %v1097 = vadd.f32 %v1000, %v1065
      %v1098 = vadd.f32 %v1001, %v1066
      %v1099 = vadd.f32 %v1002, %v1067
      %v1100 = vadd.f32 %v1003, %v1068
      %v1101 = vadd.f32 %v1004, %v1069
      %v1102 = vadd.f32 %v1005, %v1070
      %v1103 = vadd.f32 %v1006, %v1071
      %v1104 = vadd.f32 %v1007, %v1072
      %v1105 = vadd.f32 %v1008, %v1073
      %v1106 = vadd.f32 %v1009, %v1074
      %v1107 = vadd.f32 %v1010, %v1075
      %v1108 = vadd.f32 %v1011, %v1076
      %v1109 = vadd.f32 %v1012, %v1077
      %v1110 = vadd.f32 %v1013, %v1078
      %v1111 = vadd.f32 %v1014, %v1079
      %v1112 = vadd.f32 %v1015, %v1080
      %v1113 = vadd.f32 %v1016, %v1081
      %v1114 = vadd.f32 %v1017, %v1082
      %v1115 = vadd.f32 %v1018, %v1083
      %v1116 = vadd.f32 %v1019, %v1084
      %v1117 = vadd.f32 %v1020, %v1085
      %v1118 = vadd.f32 %v1021, %v1086
      %v1119 = vadd.f32 %v1022, %v1087
      %v1120 = vld [vmem:[%s925 + $0x2] sm:$0xff]
      %v1121 = vld [vmem:[%s925 + $0xa] sm:$0xff]
      %v1122 = vld [vmem:[%s925 + $0x1a] sm:$0xff]
      %v1123 = vld [vmem:[%s925 + $0x22] sm:$0xff]
      %v1124 = vld [vmem:[%s925 + $0x32] sm:$0xff]
      %v1125 = vld [vmem:[%s925 + $0x3a] sm:$0xff]
      %v1126 = vld [vmem:[%s925 + $0x4a] sm:$0xff]
      %v1127 = vld [vmem:[%s925 + $0x52] sm:$0xff]
      %v1128 = vld [vmem:[%s925 + $0x62] sm:$0xff]
      %v1129 = vld [vmem:[%s925 + $0x6a] sm:$0xff]
      %v1130 = vld [vmem:[%s925 + $0x7a] sm:$0xff]
      %v1131 = vld [vmem:[%s925 + $0x82] sm:$0xff]
      %v1132 = vld [vmem:[%s925 + $0x92] sm:$0xff]
      %v1133 = vld [vmem:[%s925 + $0x9a] sm:$0xff]
      %v1134 = vld [vmem:[%s925 + $0xaa] sm:$0xff]
      %v1135 = vld [vmem:[%s925 + $0xb2] sm:$0xff]
      %v1136 = vld [vmem:[%s925 + $0xc2] sm:$0xff]
      %v1137 = vld [vmem:[%s925 + $0xca] sm:$0xff]
      %v1138 = vld [vmem:[%s925 + $0xda] sm:$0xff]
      %v1139 = vld [vmem:[%s925 + $0xe2] sm:$0xff]
      %v1140 = vld [vmem:[%s925 + $0xf2] sm:$0xff]
      %v1141 = vld [vmem:[%s925 + $0xfa] sm:$0xff]
      %v1142 = vld [vmem:[%s925 + $0x10a] sm:$0xff]
      %v1143 = vld [vmem:[%s925 + $0x112] sm:$0xff]
      %v1144 = vld [vmem:[%s925 + $0x122] sm:$0xff]
      %v1145 = vld [vmem:[%s925 + $0x12a] sm:$0xff]
      %v1146 = vld [vmem:[%s925 + $0x13a] sm:$0xff]
      %v1147 = vld [vmem:[%s925 + $0x142] sm:$0xff]
      %v1148 = vld [vmem:[%s925 + $0x152] sm:$0xff]
      %v1149 = vld [vmem:[%s925 + $0x15a] sm:$0xff]
      %v1150 = vld [vmem:[%s925 + $0x16a] sm:$0xff]
      %v1151 = vld [vmem:[%s925 + $0x172] sm:$0xff]
      %v1152 = vperm.slane %v342, 0
      %v1153 = vmul.f32 %v1120, %v1152
      %v1154 = vmul.f32 %v1121, %v1152
      %v1155 = vmul.f32 %v1122, %v1152
      %v1156 = vmul.f32 %v1123, %v1152
      %v1157 = vmul.f32 %v1124, %v1152
      %v1158 = vmul.f32 %v1125, %v1152
      %v1159 = vmul.f32 %v1126, %v1152
      %v1160 = vmul.f32 %v1127, %v1152
      %v1161 = vmul.f32 %v1128, %v1152
      %v1162 = vmul.f32 %v1129, %v1152
      %v1163 = vmul.f32 %v1130, %v1152
      %v1164 = vmul.f32 %v1131, %v1152
      %v1165 = vmul.f32 %v1132, %v1152
      %v1166 = vmul.f32 %v1133, %v1152
      %v1167 = vmul.f32 %v1134, %v1152
      %v1168 = vmul.f32 %v1135, %v1152
      %v1169 = vmul.f32 %v1136, %v1152
      %v1170 = vmul.f32 %v1137, %v1152
      %v1171 = vmul.f32 %v1138, %v1152
      %v1172 = vmul.f32 %v1139, %v1152
      %v1173 = vmul.f32 %v1140, %v1152
      %v1174 = vmul.f32 %v1141, %v1152
      %v1175 = vmul.f32 %v1142, %v1152
      %v1176 = vmul.f32 %v1143, %v1152
      %v1177 = vmul.f32 %v1144, %v1152
      %v1178 = vmul.f32 %v1145, %v1152
      %v1179 = vmul.f32 %v1146, %v1152
      %v1180 = vmul.f32 %v1147, %v1152
      %v1181 = vmul.f32 %v1148, %v1152
      %v1182 = vmul.f32 %v1149, %v1152
      %v1183 = vmul.f32 %v1150, %v1152
      %v1184 = vmul.f32 %v1151, %v1152
      %v1185 = vadd.f32 %v1088, %v1153
      %v1186 = vadd.f32 %v1089, %v1154
      %v1187 = vadd.f32 %v1090, %v1155
      %v1188 = vadd.f32 %v1091, %v1156
      %v1189 = vadd.f32 %v1092, %v1157
      %v1190 = vadd.f32 %v1093, %v1158
      %v1191 = vadd.f32 %v1094, %v1159
      %v1192 = vadd.f32 %v1095, %v1160
      %v1193 = vadd.f32 %v1096, %v1161
      %v1194 = vadd.f32 %v1097, %v1162
      %v1195 = vadd.f32 %v1098, %v1163
      %v1196 = vadd.f32 %v1099, %v1164
      %v1197 = vadd.f32 %v1100, %v1165
      %v1198 = vadd.f32 %v1101, %v1166
      %v1199 = vadd.f32 %v1102, %v1167
      %v1200 = vadd.f32 %v1103, %v1168
      %v1201 = vadd.f32 %v1104, %v1169
      %v1202 = vadd.f32 %v1105, %v1170
      %v1203 = vadd.f32 %v1106, %v1171
      %v1204 = vadd.f32 %v1107, %v1172
      %v1205 = vadd.f32 %v1108, %v1173
      %v1206 = vadd.f32 %v1109, %v1174
      %v1207 = vadd.f32 %v1110, %v1175
      %v1208 = vadd.f32 %v1111, %v1176
      %v1209 = vadd.f32 %v1112, %v1177
      %v1210 = vadd.f32 %v1113, %v1178
      %v1211 = vadd.f32 %v1114, %v1179
      %v1212 = vadd.f32 %v1115, %v1180
      %v1213 = vadd.f32 %v1116, %v1181
      %v1214 = vadd.f32 %v1117, %v1182
      %v1215 = vadd.f32 %v1118, %v1183
      %v1216 = vadd.f32 %v1119, %v1184
      %1217 = vst.msk [vmem:[%s191] sm:$0xff] %vm225, %v1185
      %1218 = vst.msk [vmem:[%s191 + $0x8] sm:$0xff] %vm225, %v1186
      %1219 = vst.msk [vmem:[%s191 + $0x10] sm:$0xff] %vm225, %v1187
      %1220 = vst.msk [vmem:[%s191 + $0x18] sm:$0xff] %vm225, %v1188
      %1221 = vst.msk [vmem:[%s191 + $0x20] sm:$0xff] %vm225, %v1189
      %1222 = vst.msk [vmem:[%s191 + $0x28] sm:$0xff] %vm225, %v1190
      %1223 = vst.msk [vmem:[%s191 + $0x30] sm:$0xff] %vm225, %v1191
      %1224 = vst.msk [vmem:[%s191 + $0x38] sm:$0xff] %vm225, %v1192
      %1225 = vst.msk [vmem:[%s191 + $0x40] sm:$0xff] %vm225, %v1193
      %1226 = vst.msk [vmem:[%s191 + $0x48] sm:$0xff] %vm225, %v1194
      %1227 = vst.msk [vmem:[%s191 + $0x50] sm:$0xff] %vm225, %v1195
      %1228 = vst.msk [vmem:[%s191 + $0x58] sm:$0xff] %vm225, %v1196
      %1229 = vst.msk [vmem:[%s191 + $0x60] sm:$0xff] %vm225, %v1197
      %1230 = vst.msk [vmem:[%s191 + $0x68] sm:$0xff] %vm225, %v1198
      %1231 = vst.msk [vmem:[%s191 + $0x70] sm:$0xff] %vm225, %v1199
      %1232 = vst.msk [vmem:[%s191 + $0x78] sm:$0xff] %vm225, %v1200
      %1233 = vst.msk [vmem:[%s191 + $0x80] sm:$0xff] %vm225, %v1201
      %1234 = vst.msk [vmem:[%s191 + $0x88] sm:$0xff] %vm225, %v1202
      %1235 = vst.msk [vmem:[%s191 + $0x90] sm:$0xff] %vm225, %v1203
      %1236 = vst.msk [vmem:[%s191 + $0x98] sm:$0xff] %vm225, %v1204
      %1237 = vst.msk [vmem:[%s191 + $0xa0] sm:$0xff] %vm225, %v1205
      %1238 = vst.msk [vmem:[%s191 + $0xa8] sm:$0xff] %vm225, %v1206
      %1239 = vst.msk [vmem:[%s191 + $0xb0] sm:$0xff] %vm225, %v1207
      %1240 = vst.msk [vmem:[%s191 + $0xb8] sm:$0xff] %vm225, %v1208
      %1241 = vst.msk [vmem:[%s191 + $0xc0] sm:$0xff] %vm225, %v1209
      %1242 = vst.msk [vmem:[%s191 + $0xc8] sm:$0xff] %vm225, %v1210
      %1243 = vst.msk [vmem:[%s191 + $0xd0] sm:$0xff] %vm225, %v1211
      %1244 = vst.msk [vmem:[%s191 + $0xd8] sm:$0xff] %vm225, %v1212
      %1245 = vst.msk [vmem:[%s191 + $0xe0] sm:$0xff] %vm225, %v1213
      %1246 = vst.msk [vmem:[%s191 + $0xe8] sm:$0xff] %vm225, %v1214
      %1247 = vst.msk [vmem:[%s191 + $0xf0] sm:$0xff] %vm225, %v1215
      %1248 = vst.msk [vmem:[%s191 + $0xf8] sm:$0xff] %vm225, %v1216
      %p1249 = scmp.lt.s32.totalorder %s17, 1
      %s1250 = scalar_select %p1249, %s17, 1
      %p1251 = scmp.lt.s32.totalorder %s18, 0
      %s1252 = scalar_select %p1251, %s18, 0
      %s1253 = smul.addr %s1250, 32
      %s1254 = sadd.s32 %s1252, %s1253
      %s1255 = smul.addr %s1254, 8
      %s1256 = scalar_lea.vmem %s2, %s1255
      // Predicated region
      $region29: #{tpu_custom_call.1} parent=27 // pred_check
        %p1257 = pneg %p99
      $region30: #{tpu_custom_call.1} parent=27 // pred_check_branch
        %1259 = sbr.rel (%p1257) target = $region32
      $region31: #{tpu_custom_call.1} parent=27 // pred_region
        _
      $region32: #{tpu_custom_call.1} parent=27 // pred_fallthru
        _
    $region28: #{tpu_custom_call.1} parent=5 // pred_fallthru
      _
    %p1260 = scmp.le.s32.totalorder 2, %s8
    // Predicated region
    $region33: #{tpu_custom_call.1} parent=5 // pred_check
      %p1261 = pneg %p1260
    $region34: #{tpu_custom_call.1} parent=5 // pred_check_branch
      %1263 = sbr.rel (%p1261) target = $region36
    $region35: #{tpu_custom_call.1} parent=5 // pred_region
      %s1264 = ssub.s32 %s8, 2
      // Predicated region
      $region37: #{tpu_custom_call.1} parent=35 // pred_check
        %p1265 = pneg %p105
      $region38: #{tpu_custom_call.1} parent=35 // pred_check_branch
        %1267 = sbr.rel (%p1265) target = $region40
      $region39: #{tpu_custom_call.1} parent=35 // pred_region
        %p1268 = scmp.lt.s32.totalorder %s19, 1
        %s1269 = scalar_select %p1268, %s19, 1
        %p1270 = scmp.lt.s32.totalorder %s20, 0
        %s1271 = scalar_select %p1270, %s20, 0
        %s1272 = smul.addr %s1269, 32
        %s1273 = sadd.s32 %s1271, %s1272
        %s1274 = smul.addr %s1273, 8
        %s1275 = scalar_lea.vmem %s2, %s1274
      $region40: #{tpu_custom_call.1} parent=35 // pred_fallthru
        _
    $region36: #{tpu_custom_call.1} parent=5 // pred_fallthru
      _
  $region6: #{tpu_custom_call.1} parent=0 // loop_footer
    %s12 = sadd.s32 1, %s8
  $region7: #{tpu_custom_call.1} parent=0 // loop_footer_branch
    %7 = sbr.rel target = $region3
  $region8: #{tpu_custom_call.1} parent=0 // loop_exit
    _

</llo_original>
